<compile_context>
chip_gen: v7x
topology: tpu7x:2x2x1
jax: 0.10.0
libtpu: 0.0.40
codegen_flags: <defaults>
</compile_context>

<pallas_src>
import functools

import jax
import jax.numpy as jnp
from jax import lax
from jax.experimental import pallas as pl
from jax.experimental.pallas import tpu as pltpu

# Logical (PyTorch) sizes and their padded, hardware-friendly counterparts.
EMBED = 100                 # embed_size (NELL-One config)
DP = 128                    # padded embedding / out size
H1, H1P = 500, 512          # num_hidden1 (padded)
H2, H2P = 200, 256          # num_hidden2 (padded)
OUT = 100                   # out_size
LEAKY_SLOPE = 0.01          # nn.LeakyReLU default
BN_EPS = 1e-5
EPS = 1e-12                 # rsqrt epsilon (kills norm==0 NaN)


# --------------------------------------------------------------------------
# Fused kernel: RelationMetaLearner MLP + meta update + query/negative scoring
# --------------------------------------------------------------------------
def _metar_fused_kernel(x_ref, sn_ref, q_ref, n_ref,
                        w1_ref, b1_ref, s1_ref, t1_ref,
                        w2_ref, b2_ref, s2_ref, t2_ref,
                        w3_ref, s3m_ref, bias3_ref,
                        p_ref, n_out_ref,
                        *, margin, beta, coef, abla):
    tb, few, two_d = x_ref.shape
    d = two_d // 2

    # ---------------- RelationMetaLearner (rows batched on the MXU) --------
    x3 = x_ref[...]                               # (tb, few, 2*DP) f32
    x2 = x3.reshape(tb * few, two_d)              # (tb*few, 2*DP)

    def fc_bn_lrelu(h, w_ref, b_ref, s_ref, t_ref):
        # bf16 (or f32) MXU inputs, f32 accumulation; BN/LeakyReLU in f32.
        y = jnp.dot(h.astype(w_ref.dtype), w_ref[...],
                    preferred_element_type=jnp.float32)
        y = y + b_ref[...]
        y = y * s_ref[...] + t_ref[...]           # BatchNorm1d(few), eval-mode fold
        return jnp.where(y >= 0.0, y, LEAKY_SLOPE * y)

    h1 = fc_bn_lrelu(x2, w1_ref, b1_ref, s1_ref, t1_ref)
    # TODO(synk): Dropout(p=0.5) stochastic mask omitted (eval-mode identity).
    h2 = fc_bn_lrelu(h1, w2_ref, b2_ref, s2_ref, t2_ref)

    # Layer 3 (no LeakyReLU): push the mean over `few` before the matmul:
    #   rel = mean_f[(h2[f] @ W3 + b3)*s3[f] + t3[f]]
    #       = (sum_f (s3[f]/few) * h2[f]) @ W3 + mean(s3)*b3 + mean(t3)
    z = jnp.sum((h2 * s3m_ref[...]).reshape(tb, few, -1), axis=1)   # (tb, H2P)
    rel = jnp.dot(z.astype(w3_ref.dtype), w3_ref[...],
                  preferred_element_type=jnp.float32) + bias3_ref[...]  # (tb, DP)
    r = rel[:, None, :]                           # (tb, 1, DP)

    # ---------------- inner-loop meta update: rel_q = rel - beta * dL/d rel -
    if abla:
        rq = r
    else:
        sup_h, sup_t = x3[:, :, :d], x3[:, :, d:]         # (tb, few, DP)
        sn3 = sn_ref[...]
        sn_h, sn_t = sn3[:, :, :d], sn3[:, :, d:]

        up = sup_h + r - sup_t                            # (tb, few, DP)
        un = sn_h + r - sn_t
        ssp = jnp.sum(up * up, axis=-1, keepdims=True)    # (tb, few, 1)
        ssn = jnp.sum(un * un, axis=-1, keepdims=True)
        inv_p = lax.rsqrt(ssp + EPS)
        inv_n = lax.rsqrt(ssn + EPS)
        p_s = -(ssp * inv_p)                              # -||h+r-t||
        n_s = -(ssn * inv_n)
        # MarginRankingLoss(margin), y=+1, reduction='mean' over all B*few pairs.
        active = (margin - (p_s - n_s)) > 0.0             # (tb, few, 1)
        contrib = jnp.where(active, up * inv_p - un * inv_n, 0.0)
        grad = coef * jnp.sum(contrib, axis=1, keepdims=True)   # (tb, 1, DP)
        rq = r - beta * grad                              # (tb, 1, DP)

    # ---------------- EmbeddingLearner: score = -||h + r - t||_2 -----------
    q3 = q_ref[...]
    uq = q3[:, :, :d] + rq - q3[:, :, d:]                 # (tb, nq, DP)
    ssq = jnp.sum(uq * uq, axis=-1)                       # (tb, nq)  lane-dense
    p_ref[...] = (-(ssq * lax.rsqrt(ssq + EPS)))[:, None, :]

    n3 = n_ref[...]
    uneg = n3[:, :, :d] + rq - n3[:, :, d:]               # (tb, nn, DP)
    ssn2 = jnp.sum(uneg * uneg, axis=-1)                  # (tb, nn)
    n_out_ref[...] = (-(ssn2 * lax.rsqrt(ssn2 + EPS)))[:, None, :]


# --------------------------------------------------------------------------
# Wrapper
# --------------------------------------------------------------------------
def _pick_tb(batch, rows_per_task, max_rows=512):
    """Tasks per grid tile: batch rows on the MXU, but keep >=2 grid steps
    when the batch allows (keeps both v7x TensorCores busy)."""
    divs = [d for d in range(1, batch + 1)
            if batch % d == 0 and d * rows_per_task <= max_rows]
    if not divs:
        return 1
    multi = [d for d in divs if batch // d >= 2]
    return max(multi) if multi else max(divs)


def metar_forward(params, ent_table, task, *, margin, beta, abla=False,
                  dot_dtype=jnp.bfloat16):
    # task: (support, support_negative, query, negative) int index arrays (B, n, 2)
    assert ent_table.shape[-1] == DP, "entity table must be zero-padded to DP lanes"
    # TODO(synk): embedding gather left to XLA (jnp.take); a scalar-prefetch DMA
    # gather inside the kernel would avoid the extra HBM pass for huge tables.
    support, support_negative, query, negative = [
        jnp.take(ent_table, idx, axis=0) for idx in task   # (B, n, 2, DP) each
    ]
    B, few = support.shape[:2]
    num_sn = support_negative.shape[1]
    num_q = query.shape[1]
    num_n = negative.shape[1]
    if not abla:
        assert num_sn == few, "MarginRankingLoss broadcast requires num_sn == few"

    # (B, n, 2, DP) -> (B, n, 2*DP): lane-aligned merge (head | tail on lanes).
    x = support.reshape(B, few, 2 * DP)
    sn = support_negative.reshape(B, num_sn, 2 * DP)
    q = query.reshape(B, num_q, 2 * DP)
    n = negative.reshape(B, num_n, 2 * DP)

    tb = _pick_tb(B, max(few, num_sn, num_q, num_n))
    # NOTE: coef bakes the full batch size in — matches MetaR, where the torch
    # MarginRankingLoss averages over all B*few hinge terms in one call.
    coef = 1.0 / (B * few)

    # BatchNorm1d(few) eval-mode scale/shift, tiled to the (tb*few) row block.
    s1 = jnp.tile(params["s1"], (tb, 1)); t1 = jnp.tile(params["t1"], (tb, 1))
    s2 = jnp.tile(params["s2"], (tb, 1)); t2 = jnp.tile(params["t2"], (tb, 1))
    s3m = jnp.tile(params["s3"] / few, (tb, 1))
    # Layer-3 bias with the few-mean folded in; masked to the real OUT lanes so
    # pad lanes of rel stay exactly zero.
    valid = (jnp.arange(DP) < OUT).astype(jnp.float32)[None, :]
    bias3 = (jnp.mean(params["s3"]) * params["b3"] + jnp.mean(params["t3"])) * valid

    # Cast weights once in the wrapper (halves weight DMA on v6e/v7x; v5e MXU is
    # also bf16-native).  Pass dot_dtype=jnp.float32 for exact f32 matmuls.
    w1 = params["w1"].astype(dot_dtype)
    w2 = params["w2"].astype(dot_dtype)
    w3 = params["w3"].astype(dot_dtype)
    b1, b2 = params["b1"], params["b2"]

    kern = functools.partial(_metar_fused_kernel, margin=float(margin),
                             beta=float(beta), coef=float(coef), abla=bool(abla))

    def full_spec(a):
        nd = a.ndim
        return pl.BlockSpec(a.shape, lambda b, _nd=nd: (0,) * _nd)

    args = [x, sn, q, n, w1, b1, s1, t1, w2, b2, s2, t2, w3, s3m, bias3]
    in_specs = [
        pl.BlockSpec((tb, few, 2 * DP), lambda b: (b, 0, 0)),
        pl.BlockSpec((tb, num_sn, 2 * DP), lambda b: (b, 0, 0)),
        pl.BlockSpec((tb, num_q, 2 * DP), lambda b: (b, 0, 0)),
        pl.BlockSpec((tb, num_n, 2 * DP), lambda b: (b, 0, 0)),
    ] + [full_spec(a) for a in args[4:]]

    p_score, n_score = pl.pallas_call(
        kern,
        out_shape=(jax.ShapeDtypeStruct((B, 1, num_q), jnp.float32),
                   jax.ShapeDtypeStruct((B, 1, num_n), jnp.float32)),
        grid=(B // tb,),
        in_specs=in_specs,
        out_specs=(pl.BlockSpec((tb, 1, num_q), lambda b: (b, 0, 0)),
                   pl.BlockSpec((tb, 1, num_n), lambda b: (b, 0, 0))),
        compiler_params=pltpu.CompilerParams(dimension_semantics=("parallel",)),
    )(*args)
    return p_score[:, 0, :], n_score[:, 0, :]


# --------------------------------------------------------------------------
# Parameters (deterministic init mirroring the module's __init__), zero-padded
# --------------------------------------------------------------------------
def init_params(key, few):
    keys = jax.random.split(key, 6)

    def xavier(k, fi, fo):
        std = (2.0 / (fi + fo)) ** 0.5
        return std * jax.random.normal(k, (fi, fo), jnp.float32)

    def bias(k, fi, m):
        bound = 1.0 / (fi ** 0.5)
        return jax.random.uniform(k, (1, m), jnp.float32, -bound, bound)

    w1 = xavier(keys[0], 2 * EMBED, H1); b1 = bias(keys[1], 2 * EMBED, H1)
    w2 = xavier(keys[2], H1, H2);        b2 = bias(keys[3], H1, H2)
    w3 = xavier(keys[4], H2, OUT);       b3 = bias(keys[5], H2, OUT)

    # Zero-pad to (8,128)/MXU friendly sizes; the extra rows/cols are zero so the
    # math matches the unpadded model exactly.
    w1p = jnp.zeros((2 * DP, H1P), jnp.float32)
    w1p = w1p.at[:EMBED, :H1].set(w1[:EMBED])            # head-embedding rows
    w1p = w1p.at[DP:DP + EMBED, :H1].set(w1[EMBED:])     # tail-embedding rows
    b1p = jnp.zeros((1, H1P), jnp.float32).at[:, :H1].set(b1)
    w2p = jnp.zeros((H1P, H2P), jnp.float32).at[:H1, :H2].set(w2)
    b2p = jnp.zeros((1, H2P), jnp.float32).at[:, :H2].set(b2)
    w3p = jnp.zeros((H2P, DP), jnp.float32).at[:H2, :OUT].set(w3)
    b3p = jnp.zeros((1, DP), jnp.float32).at[:, :OUT].set(b3)

    p = {"w1": w1p, "b1": b1p, "w2": w2p, "b2": b2p, "w3": w3p, "b3": b3p}

    # BatchNorm1d(few): fresh eval-mode stats (gamma=1, beta=0, mean=0, var=1)
    # folded into per-"few"-channel scale/shift.
    # TODO(synk): training-mode BN (batch statistics over (B, hidden)) not modeled.
    scale = jnp.ones((few, 1), jnp.float32) / jnp.sqrt(1.0 + BN_EPS)
    shift = jnp.zeros((few, 1), jnp.float32)
    for i in (1, 2, 3):
        p[f"s{i}"] = scale
        p[f"t{i}"] = shift
    return p


# --------------------------------------------------------------------------
if __name__ == "__main__":
    key = jax.random.PRNGKey(0)
    B, few, num_q, num_n = 2, 3, 4, 4
    num_ent = 32

    k_ent, k_par, k_s, k_sn, k_q, k_n = jax.random.split(key, 6)
    ent = jax.random.normal(k_ent, (num_ent, EMBED), jnp.float32)
    ent_padded = jnp.pad(ent, ((0, 0), (0, DP - EMBED)))   # pad once, lane-aligned
    params = init_params(k_par, few)

    task = (
        jax.random.randint(k_s, (B, few, 2), 0, num_ent),    # support
        jax.random.randint(k_sn, (B, few, 2), 0, num_ent),   # support_negative
        jax.random.randint(k_q, (B, num_q, 2), 0, num_ent),  # query
        jax.random.randint(k_n, (B, num_n, 2), 0, num_ent),  # negative
    )

    fwd = jax.jit(functools.partial(metar_forward, margin=1.0, beta=5.0))
    p_score, n_score = fwd(params, ent_padded, task)
    jax.block_until_ready((p_score, n_score))

    assert p_score.shape == (B, num_q) and n_score.shape == (B, num_n)
    assert bool(jnp.all(jnp.isfinite(p_score))) and bool(jnp.all(jnp.isfinite(n_score)))
    print("KERNEL_OK")
</pallas_src>

<mosaic_0001>
module attributes {stable_mosaic.version = 11 : i64} {
  func.func @_metar_fused_kernel(%arg0: i32, %arg1: memref<1x3x256xf32, #tpu.memory_space<vmem>>, %arg2: memref<1x3x256xf32, #tpu.memory_space<vmem>>, %arg3: memref<1x4x256xf32, #tpu.memory_space<vmem>>, %arg4: memref<1x4x256xf32, #tpu.memory_space<vmem>>, %arg5: memref<256x512xbf16, #tpu.memory_space<vmem>>, %arg6: memref<1x512xf32, #tpu.memory_space<vmem>>, %arg7: memref<3x1xf32, #tpu.memory_space<vmem>>, %arg8: memref<3x1xf32, #tpu.memory_space<vmem>>, %arg9: memref<512x256xbf16, #tpu.memory_space<vmem>>, %arg10: memref<1x256xf32, #tpu.memory_space<vmem>>, %arg11: memref<3x1xf32, #tpu.memory_space<vmem>>, %arg12: memref<3x1xf32, #tpu.memory_space<vmem>>, %arg13: memref<256x128xbf16, #tpu.memory_space<vmem>>, %arg14: memref<3x1xf32, #tpu.memory_space<vmem>>, %arg15: memref<1x128xf32, #tpu.memory_space<vmem>>, %arg16: memref<1x1x4xf32, #tpu.memory_space<vmem>>, %arg17: memref<1x1x4xf32, #tpu.memory_space<vmem>>) attributes {dimension_semantics = [#tpu.dimension_semantics<parallel>], iteration_bounds = array<i64: 2>, scalar_prefetch = 0 : i64, scratch_operands = 0 : i64, tpu.core_type = #tpu.core_type<tc>, window_params = [{transform_indices = @transform_0, window_bounds = array<i64: 1, 3, 256>}, {transform_indices = @transform_1, window_bounds = array<i64: 1, 3, 256>}, {transform_indices = @transform_2, window_bounds = array<i64: 1, 4, 256>}, {transform_indices = @transform_3, window_bounds = array<i64: 1, 4, 256>}, {pipeline_mode = #tpu.pipeline_mode<synchronous>, transform_indices = @transform_4, window_bounds = array<i64: 256, 512>}, {pipeline_mode = #tpu.pipeline_mode<synchronous>, transform_indices = @transform_5, window_bounds = array<i64: 1, 512>}, {pipeline_mode = #tpu.pipeline_mode<synchronous>, transform_indices = @transform_6, window_bounds = array<i64: 3, 1>}, {pipeline_mode = #tpu.pipeline_mode<synchronous>, transform_indices = @transform_7, window_bounds = array<i64: 3, 1>}, {pipeline_mode = #tpu.pipeline_mode<synchronous>, transform_indices = @transform_8, window_bounds = array<i64: 512, 256>}, {pipeline_mode = #tpu.pipeline_mode<synchronous>, transform_indices = @transform_9, window_bounds = array<i64: 1, 256>}, {pipeline_mode = #tpu.pipeline_mode<synchronous>, transform_indices = @transform_10, window_bounds = array<i64: 3, 1>}, {pipeline_mode = #tpu.pipeline_mode<synchronous>, transform_indices = @transform_11, window_bounds = array<i64: 3, 1>}, {pipeline_mode = #tpu.pipeline_mode<synchronous>, transform_indices = @transform_12, window_bounds = array<i64: 256, 128>}, {pipeline_mode = #tpu.pipeline_mode<synchronous>, transform_indices = @transform_13, window_bounds = array<i64: 3, 1>}, {pipeline_mode = #tpu.pipeline_mode<synchronous>, transform_indices = @transform_14, window_bounds = array<i64: 1, 128>}, {transform_indices = @transform_15, window_bounds = array<i64: 1, 1, 4>}, {transform_indices = @transform_16, window_bounds = array<i64: 1, 1, 4>}]} {
    %c0 = arith.constant 0 : index
    %c0_0 = arith.constant 0 : index
    %c0_1 = arith.constant 0 : index
    %0 = vector.load %arg1[%c0, %c0_0, %c0_1] : memref<1x3x256xf32, #tpu.memory_space<vmem>>, vector<1x3x256xf32>
    %1 = vector.shape_cast %0 : vector<1x3x256xf32> to vector<3x256xf32>
    %2 = arith.truncf %1 : vector<3x256xf32> to vector<3x256xbf16>
    %c0_2 = arith.constant 0 : index
    %c0_3 = arith.constant 0 : index
    %3 = vector.load %arg5[%c0_2, %c0_3] : memref<256x512xbf16, #tpu.memory_space<vmem>>, vector<256x512xbf16>
    %cst = arith.constant dense<0.000000e+00> : vector<3x512xf32>
    %4 = tpu.matmul %2, %3, %cst {dimension_numbers = #tpu.dot_dimension_numbers<[1], [0], [0], [1], [0, 0, 1, 1], [], []>} : vector<3x256xbf16>, vector<256x512xbf16>, vector<3x512xf32> -> vector<3x512xf32>
    %c0_4 = arith.constant 0 : index
    %c0_5 = arith.constant 0 : index
    %5 = vector.load %arg6[%c0_4, %c0_5] : memref<1x512xf32, #tpu.memory_space<vmem>>, vector<1x512xf32>
    %6 = vector.broadcast %5 : vector<1x512xf32> to vector<3x512xf32>
    %7 = arith.addf %4, %6 : vector<3x512xf32>
    %c0_6 = arith.constant 0 : index
    %c0_7 = arith.constant 0 : index
    %8 = vector.load %arg7[%c0_6, %c0_7] : memref<3x1xf32, #tpu.memory_space<vmem>>, vector<3x1xf32>
    %9 = vector.broadcast %8 : vector<3x1xf32> to vector<3x512xf32>
    %10 = arith.mulf %7, %9 : vector<3x512xf32>
    %c0_8 = arith.constant 0 : index
    %c0_9 = arith.constant 0 : index
    %11 = vector.load %arg8[%c0_8, %c0_9] : memref<3x1xf32, #tpu.memory_space<vmem>>, vector<3x1xf32>
    %12 = vector.broadcast %11 : vector<3x1xf32> to vector<3x512xf32>
    %13 = arith.addf %10, %12 : vector<3x512xf32>
    %cst_10 = arith.constant 0.000000e+00 : f32
    %14 = vector.broadcast %cst_10 : f32 to vector<3x512xf32>
    %15 = arith.cmpf oge, %13, %14 : vector<3x512xf32>
    %cst_11 = arith.constant 0.00999999977 : f32
    %16 = vector.broadcast %cst_11 : f32 to vector<3x512xf32>
    %17 = arith.mulf %16, %13 : vector<3x512xf32>
    %18 = arith.select %15, %13, %17 : vector<3x512xi1>, vector<3x512xf32>
    %19 = arith.truncf %18 : vector<3x512xf32> to vector<3x512xbf16>
    %c0_12 = arith.constant 0 : index
    %c0_13 = arith.constant 0 : index
    %20 = vector.load %arg9[%c0_12, %c0_13] : memref<512x256xbf16, #tpu.memory_space<vmem>>, vector<512x256xbf16>
    %cst_14 = arith.constant dense<0.000000e+00> : vector<3x256xf32>
    %21 = tpu.matmul %19, %20, %cst_14 {dimension_numbers = #tpu.dot_dimension_numbers<[1], [0], [0], [1], [0, 0, 1, 1], [], []>} : vector<3x512xbf16>, vector<512x256xbf16>, vector<3x256xf32> -> vector<3x256xf32>
    %c0_15 = arith.constant 0 : index
    %c0_16 = arith.constant 0 : index
    %22 = vector.load %arg10[%c0_15, %c0_16] : memref<1x256xf32, #tpu.memory_space<vmem>>, vector<1x256xf32>
    %23 = vector.broadcast %22 : vector<1x256xf32> to vector<3x256xf32>
    %24 = arith.addf %21, %23 : vector<3x256xf32>
    %c0_17 = arith.constant 0 : index
    %c0_18 = arith.constant 0 : index
    %25 = vector.load %arg11[%c0_17, %c0_18] : memref<3x1xf32, #tpu.memory_space<vmem>>, vector<3x1xf32>
    %26 = vector.broadcast %25 : vector<3x1xf32> to vector<3x256xf32>
    %27 = arith.mulf %24, %26 : vector<3x256xf32>
    %c0_19 = arith.constant 0 : index
    %c0_20 = arith.constant 0 : index
    %28 = vector.load %arg12[%c0_19, %c0_20] : memref<3x1xf32, #tpu.memory_space<vmem>>, vector<3x1xf32>
    %29 = vector.broadcast %28 : vector<3x1xf32> to vector<3x256xf32>
    %30 = arith.addf %27, %29 : vector<3x256xf32>
    %cst_21 = arith.constant 0.000000e+00 : f32
    %31 = vector.broadcast %cst_21 : f32 to vector<3x256xf32>
    %32 = arith.cmpf oge, %30, %31 : vector<3x256xf32>
    %cst_22 = arith.constant 0.00999999977 : f32
    %33 = vector.broadcast %cst_22 : f32 to vector<3x256xf32>
    %34 = arith.mulf %33, %30 : vector<3x256xf32>
    %35 = arith.select %32, %30, %34 : vector<3x256xi1>, vector<3x256xf32>
    %c0_23 = arith.constant 0 : index
    %c0_24 = arith.constant 0 : index
    %36 = vector.load %arg14[%c0_23, %c0_24] : memref<3x1xf32, #tpu.memory_space<vmem>>, vector<3x1xf32>
    %37 = vector.broadcast %36 : vector<3x1xf32> to vector<3x256xf32>
    %38 = arith.mulf %35, %37 : vector<3x256xf32>
    %39 = vector.shape_cast %38 : vector<3x256xf32> to vector<1x3x256xf32>
    %cst_25 = arith.constant dense<0.000000e+00> : vector<1x256xf32>
    %40 = vector.multi_reduction <add>, %39, %cst_25 [1] : vector<1x3x256xf32> to vector<1x256xf32>
    %41 = arith.truncf %40 : vector<1x256xf32> to vector<1x256xbf16>
    %c0_26 = arith.constant 0 : index
    %c0_27 = arith.constant 0 : index
    %42 = vector.load %arg13[%c0_26, %c0_27] : memref<256x128xbf16, #tpu.memory_space<vmem>>, vector<256x128xbf16>
    %cst_28 = arith.constant dense<0.000000e+00> : vector<1x128xf32>
    %43 = tpu.matmul %41, %42, %cst_28 {dimension_numbers = #tpu.dot_dimension_numbers<[1], [0], [0], [1], [0, 0, 1, 1], [], []>} : vector<1x256xbf16>, vector<256x128xbf16>, vector<1x128xf32> -> vector<1x128xf32>
    %c0_29 = arith.constant 0 : index
    %c0_30 = arith.constant 0 : index
    %44 = vector.load %arg15[%c0_29, %c0_30] : memref<1x128xf32, #tpu.memory_space<vmem>>, vector<1x128xf32>
    %45 = arith.addf %43, %44 : vector<1x128xf32>
    %46 = vector.shape_cast %45 : vector<1x128xf32> to vector<1x1x128xf32>
    %47 = vector.extract_strided_slice %0 {offsets = [0, 0, 0], sizes = [1, 3, 128], strides = [1, 1, 1]} : vector<1x3x256xf32> to vector<1x3x128xf32>
    %48 = vector.extract_strided_slice %0 {offsets = [0, 0, 128], sizes = [1, 3, 128], strides = [1, 1, 1]} : vector<1x3x256xf32> to vector<1x3x128xf32>
    %c0_31 = arith.constant 0 : index
    %c0_32 = arith.constant 0 : index
    %c0_33 = arith.constant 0 : index
    %49 = vector.load %arg2[%c0_31, %c0_32, %c0_33] : memref<1x3x256xf32, #tpu.memory_space<vmem>>, vector<1x3x256xf32>
    %50 = vector.extract_strided_slice %49 {offsets = [0, 0, 0], sizes = [1, 3, 128], strides = [1, 1, 1]} : vector<1x3x256xf32> to vector<1x3x128xf32>
    %51 = vector.extract_strided_slice %49 {offsets = [0, 0, 128], sizes = [1, 3, 128], strides = [1, 1, 1]} : vector<1x3x256xf32> to vector<1x3x128xf32>
    %52 = vector.broadcast %46 : vector<1x1x128xf32> to vector<1x3x128xf32>
    %53 = arith.addf %47, %52 : vector<1x3x128xf32>
    %54 = arith.subf %53, %48 : vector<1x3x128xf32>
    %55 = vector.broadcast %46 : vector<1x1x128xf32> to vector<1x3x128xf32>
    %56 = arith.addf %50, %55 : vector<1x3x128xf32>
    %57 = arith.subf %56, %51 : vector<1x3x128xf32>
    %58 = arith.mulf %54, %54 : vector<1x3x128xf32>
    %cst_34 = arith.constant dense<0.000000e+00> : vector<1x3xf32>
    %59 = vector.multi_reduction <add>, %58, %cst_34 [2] : vector<1x3x128xf32> to vector<1x3xf32>
    %60 = vector.shape_cast %59 : vector<1x3xf32> to vector<1x3x1xf32>
    %61 = arith.mulf %57, %57 : vector<1x3x128xf32>
    %cst_35 = arith.constant dense<0.000000e+00> : vector<1x3xf32>
    %62 = vector.multi_reduction <add>, %61, %cst_35 [2] : vector<1x3x128xf32> to vector<1x3xf32>
    %63 = vector.shape_cast %62 : vector<1x3xf32> to vector<1x3x1xf32>
    %cst_36 = arith.constant 9.99999996E-13 : f32
    %64 = vector.broadcast %cst_36 : f32 to vector<1x3x1xf32>
    %65 = arith.addf %60, %64 : vector<1x3x1xf32>
    %66 = math.rsqrt %65 : vector<1x3x1xf32>
    %cst_37 = arith.constant 9.99999996E-13 : f32
    %67 = vector.broadcast %cst_37 : f32 to vector<1x3x1xf32>
    %68 = arith.addf %63, %67 : vector<1x3x1xf32>
    %69 = math.rsqrt %68 : vector<1x3x1xf32>
    %70 = arith.mulf %60, %66 : vector<1x3x1xf32>
    %cst_38 = arith.constant 0.000000e+00 : f32
    %71 = vector.broadcast %cst_38 : f32 to vector<1x3x1xf32>
    %72 = arith.subf %71, %70 : vector<1x3x1xf32>
    %73 = arith.mulf %63, %69 : vector<1x3x1xf32>
    %cst_39 = arith.constant 0.000000e+00 : f32
    %74 = vector.broadcast %cst_39 : f32 to vector<1x3x1xf32>
    %75 = arith.subf %74, %73 : vector<1x3x1xf32>
    %76 = arith.subf %72, %75 : vector<1x3x1xf32>
    %cst_40 = arith.constant 1.000000e+00 : f32
    %77 = vector.broadcast %cst_40 : f32 to vector<1x3x1xf32>
    %78 = arith.subf %77, %76 : vector<1x3x1xf32>
    %cst_41 = arith.constant 0.000000e+00 : f32
    %79 = vector.broadcast %cst_41 : f32 to vector<1x3x1xf32>
    %80 = arith.cmpf ogt, %78, %79 : vector<1x3x1xf32>
    %81 = vector.broadcast %66 : vector<1x3x1xf32> to vector<1x3x128xf32>
    %82 = arith.mulf %54, %81 : vector<1x3x128xf32>
    %83 = vector.broadcast %69 : vector<1x3x1xf32> to vector<1x3x128xf32>
    %84 = arith.mulf %57, %83 : vector<1x3x128xf32>
    %85 = arith.subf %82, %84 : vector<1x3x128xf32>
    %cst_42 = arith.constant 0.000000e+00 : f32
    %86 = vector.shape_cast %80 : vector<1x3x1xi1> to vector<1x3x1xi1>
    %87 = vector.broadcast %86 : vector<1x3x1xi1> to vector<1x3x128xi1>
    %88 = vector.broadcast %cst_42 : f32 to vector<1x3x128xf32>
    %89 = arith.select %87, %85, %88 : vector<1x3x128xi1>, vector<1x3x128xf32>
    %cst_43 = arith.constant dense<0.000000e+00> : vector<1x128xf32>
    %90 = vector.multi_reduction <add>, %89, %cst_43 [1] : vector<1x3x128xf32> to vector<1x128xf32>
    %91 = vector.shape_cast %90 : vector<1x128xf32> to vector<1x1x128xf32>
    %cst_44 = arith.constant 0.166666672 : f32
    %92 = vector.broadcast %cst_44 : f32 to vector<1x1x128xf32>
    %93 = arith.mulf %92, %91 : vector<1x1x128xf32>
    %cst_45 = arith.constant 5.000000e+00 : f32
    %94 = vector.broadcast %cst_45 : f32 to vector<1x1x128xf32>
    %95 = arith.mulf %94, %93 : vector<1x1x128xf32>
    %96 = arith.subf %46, %95 : vector<1x1x128xf32>
    %c0_46 = arith.constant 0 : index
    %c0_47 = arith.constant 0 : index
    %c0_48 = arith.constant 0 : index
    %97 = vector.load %arg3[%c0_46, %c0_47, %c0_48] : memref<1x4x256xf32, #tpu.memory_space<vmem>>, vector<1x4x256xf32>
    %98 = vector.extract_strided_slice %97 {offsets = [0, 0, 0], sizes = [1, 4, 128], strides = [1, 1, 1]} : vector<1x4x256xf32> to vector<1x4x128xf32>
    %99 = vector.broadcast %96 : vector<1x1x128xf32> to vector<1x4x128xf32>
    %100 = arith.addf %98, %99 : vector<1x4x128xf32>
    %101 = vector.extract_strided_slice %97 {offsets = [0, 0, 128], sizes = [1, 4, 128], strides = [1, 1, 1]} : vector<1x4x256xf32> to vector<1x4x128xf32>
    %102 = arith.subf %100, %101 : vector<1x4x128xf32>
    %103 = arith.mulf %102, %102 : vector<1x4x128xf32>
    %cst_49 = arith.constant dense<0.000000e+00> : vector<1x4xf32>
    %104 = vector.multi_reduction <add>, %103, %cst_49 [2] : vector<1x4x128xf32> to vector<1x4xf32>
    %cst_50 = arith.constant 9.99999996E-13 : f32
    %105 = vector.broadcast %cst_50 : f32 to vector<1x4xf32>
    %106 = arith.addf %104, %105 : vector<1x4xf32>
    %107 = math.rsqrt %106 : vector<1x4xf32>
    %108 = arith.mulf %104, %107 : vector<1x4xf32>
    %cst_51 = arith.constant 0.000000e+00 : f32
    %109 = vector.broadcast %cst_51 : f32 to vector<1x4xf32>
    %110 = arith.subf %109, %108 : vector<1x4xf32>
    %111 = vector.shape_cast %110 : vector<1x4xf32> to vector<1x1x4xf32>
    %c0_52 = arith.constant 0 : index
    %c0_53 = arith.constant 0 : index
    %c0_54 = arith.constant 0 : index
    %112 = vector.load %arg16[%c0_52, %c0_53, %c0_54] : memref<1x1x4xf32, #tpu.memory_space<vmem>>, vector<1x1x4xf32>
    tpu.vector_store %arg16[%c0_52, %c0_53, %c0_54], %111 {strides = array<i32>} : memref<1x1x4xf32, #tpu.memory_space<vmem>>, vector<1x1x4xf32>,
    %c0_55 = arith.constant 0 : index
    %c0_56 = arith.constant 0 : index
    %c0_57 = arith.constant 0 : index
    %113 = vector.load %arg4[%c0_55, %c0_56, %c0_57] : memref<1x4x256xf32, #tpu.memory_space<vmem>>, vector<1x4x256xf32>
    %114 = vector.extract_strided_slice %113 {offsets = [0, 0, 0], sizes = [1, 4, 128], strides = [1, 1, 1]} : vector<1x4x256xf32> to vector<1x4x128xf32>
    %115 = vector.broadcast %96 : vector<1x1x128xf32> to vector<1x4x128xf32>
    %116 = arith.addf %114, %115 : vector<1x4x128xf32>
    %117 = vector.extract_strided_slice %113 {offsets = [0, 0, 128], sizes = [1, 4, 128], strides = [1, 1, 1]} : vector<1x4x256xf32> to vector<1x4x128xf32>
    %118 = arith.subf %116, %117 : vector<1x4x128xf32>
    %119 = arith.mulf %118, %118 : vector<1x4x128xf32>
    %cst_58 = arith.constant dense<0.000000e+00> : vector<1x4xf32>
    %120 = vector.multi_reduction <add>, %119, %cst_58 [2] : vector<1x4x128xf32> to vector<1x4xf32>
    %cst_59 = arith.constant 9.99999996E-13 : f32
    %121 = vector.broadcast %cst_59 : f32 to vector<1x4xf32>
    %122 = arith.addf %120, %121 : vector<1x4xf32>
    %123 = math.rsqrt %122 : vector<1x4xf32>
    %124 = arith.mulf %120, %123 : vector<1x4xf32>
    %cst_60 = arith.constant 0.000000e+00 : f32
    %125 = vector.broadcast %cst_60 : f32 to vector<1x4xf32>
    %126 = arith.subf %125, %124 : vector<1x4xf32>
    %127 = vector.shape_cast %126 : vector<1x4xf32> to vector<1x1x4xf32>
    %c0_61 = arith.constant 0 : index
    %c0_62 = arith.constant 0 : index
    %c0_63 = arith.constant 0 : index
    %128 = vector.load %arg17[%c0_61, %c0_62, %c0_63] : memref<1x1x4xf32, #tpu.memory_space<vmem>>, vector<1x1x4xf32>
    tpu.vector_store %arg17[%c0_61, %c0_62, %c0_63], %127 {strides = array<i32>} : memref<1x1x4xf32, #tpu.memory_space<vmem>>, vector<1x1x4xf32>,
    return
  }
  func.func @transform_0(%arg0: i32) -> (i32, i32, i32) {
    %c0_i32 = arith.constant 0 : i32
    %c0_i32_0 = arith.constant 0 : i32
    %c0_i32_1 = arith.constant 0 : i32
    return %arg0, %c0_i32, %c0_i32_0 : i32, i32, i32
  }
  func.func @transform_1(%arg0: i32) -> (i32, i32, i32) {
    %c0_i32 = arith.constant 0 : i32
    %c0_i32_0 = arith.constant 0 : i32
    %c0_i32_1 = arith.constant 0 : i32
    return %arg0, %c0_i32, %c0_i32_0 : i32, i32, i32
  }
  func.func @transform_2(%arg0: i32) -> (i32, i32, i32) {
    %c0_i32 = arith.constant 0 : i32
    %c0_i32_0 = arith.constant 0 : i32
    %c0_i32_1 = arith.constant 0 : i32
    return %arg0, %c0_i32, %c0_i32_0 : i32, i32, i32
  }
  func.func @transform_3(%arg0: i32) -> (i32, i32, i32) {
    %c0_i32 = arith.constant 0 : i32
    %c0_i32_0 = arith.constant 0 : i32
    %c0_i32_1 = arith.constant 0 : i32
    return %arg0, %c0_i32, %c0_i32_0 : i32, i32, i32
  }
  func.func @transform_4(%arg0: i32) -> (i32, i32) {
    %c0_i32 = arith.constant 0 : i32
    %c0_i32_0 = arith.constant 0 : i32
    %c0_i32_1 = arith.constant 0 : i32
    return %c0_i32, %c0_i32_0 : i32, i32
  }
  func.func @transform_5(%arg0: i32) -> (i32, i32) {
    %c0_i32 = arith.constant 0 : i32
    %c0_i32_0 = arith.constant 0 : i32
    %c0_i32_1 = arith.constant 0 : i32
    return %c0_i32, %c0_i32_0 : i32, i32
  }
  func.func @transform_6(%arg0: i32) -> (i32, i32) {
    %c0_i32 = arith.constant 0 : i32
    %c0_i32_0 = arith.constant 0 : i32
    %c0_i32_1 = arith.constant 0 : i32
    return %c0_i32, %c0_i32_0 : i32, i32
  }
  func.func @transform_7(%arg0: i32) -> (i32, i32) {
    %c0_i32 = arith.constant 0 : i32
    %c0_i32_0 = arith.constant 0 : i32
    %c0_i32_1 = arith.constant 0 : i32
    return %c0_i32, %c0_i32_0 : i32, i32
  }
  func.func @transform_8(%arg0: i32) -> (i32, i32) {
    %c0_i32 = arith.constant 0 : i32
    %c0_i32_0 = arith.constant 0 : i32
    %c0_i32_1 = arith.constant 0 : i32
    return %c0_i32, %c0_i32_0 : i32, i32
  }
  func.func @transform_9(%arg0: i32) -> (i32, i32) {
    %c0_i32 = arith.constant 0 : i32
    %c0_i32_0 = arith.constant 0 : i32
    %c0_i32_1 = arith.constant 0 : i32
    return %c0_i32, %c0_i32_0 : i32, i32
  }
  func.func @transform_10(%arg0: i32) -> (i32, i32) {
    %c0_i32 = arith.constant 0 : i32
    %c0_i32_0 = arith.constant 0 : i32
    %c0_i32_1 = arith.constant 0 : i32
    return %c0_i32, %c0_i32_0 : i32, i32
  }
  func.func @transform_11(%arg0: i32) -> (i32, i32) {
    %c0_i32 = arith.constant 0 : i32
    %c0_i32_0 = arith.constant 0 : i32
    %c0_i32_1 = arith.constant 0 : i32
    return %c0_i32, %c0_i32_0 : i32, i32
  }
  func.func @transform_12(%arg0: i32) -> (i32, i32) {
    %c0_i32 = arith.constant 0 : i32
    %c0_i32_0 = arith.constant 0 : i32
    %c0_i32_1 = arith.constant 0 : i32
    return %c0_i32, %c0_i32_0 : i32, i32
  }
  func.func @transform_13(%arg0: i32) -> (i32, i32) {
    %c0_i32 = arith.constant 0 : i32
    %c0_i32_0 = arith.constant 0 : i32
    %c0_i32_1 = arith.constant 0 : i32
    return %c0_i32, %c0_i32_0 : i32, i32
  }
  func.func @transform_14(%arg0: i32) -> (i32, i32) {
    %c0_i32 = arith.constant 0 : i32
    %c0_i32_0 = arith.constant 0 : i32
    %c0_i32_1 = arith.constant 0 : i32
    return %c0_i32, %c0_i32_0 : i32, i32
  }
  func.func @transform_15(%arg0: i32) -> (i32, i32, i32) {
    %c0_i32 = arith.constant 0 : i32
    %c0_i32_0 = arith.constant 0 : i32
    %c0_i32_1 = arith.constant 0 : i32
    return %arg0, %c0_i32, %c0_i32_0 : i32, i32, i32
  }
  func.func @transform_16(%arg0: i32) -> (i32, i32, i32) {
    %c0_i32 = arith.constant 0 : i32
    %c0_i32_0 = arith.constant 0 : i32
    %c0_i32_1 = arith.constant 0 : i32
    return %arg0, %c0_i32, %c0_i32_0 : i32, i32, i32
  }
}

</mosaic_0001>

<llo_original>
// kernel: metar_forward.1
$region0: #{metar_forward.1}
  #allocation0 [shape = 'u32[]', space=smem, size = 0x4, offset = 0x4, fixed_abs, tag = 'smem constant byte address 0x4 - core index']
  #allocation1 [shape = 'u32[144,128]{1,0:T(1,128)}', space=vmem, size = 0x12000, scoped, tag = 'internal scratch']
  %s0 = inlined_call_operand.vmem [shape: f32[2,3,256], index: 0, kind: input, shape index: {}]
  %s1 = inlined_call_operand.vmem [shape: f32[2,3,256], index: 1, kind: input, shape index: {}]
  %s2 = inlined_call_operand.vmem [shape: f32[2,4,256], index: 2, kind: input, shape index: {}]
  %s3 = inlined_call_operand.vmem [shape: f32[2,4,256], index: 3, kind: input, shape index: {}]
  %s4 = inlined_call_operand.vmem [shape: bf16[256,512], index: 4, kind: input, shape index: {}]
  %s5 = inlined_call_operand.vmem [shape: f32[1,512], index: 5, kind: input, shape index: {}]
  %s6 = inlined_call_operand.vmem [shape: f32[3,1], index: 6, kind: input, shape index: {}]
  %s7 = inlined_call_operand.vmem [shape: f32[3,1], index: 7, kind: input, shape index: {}]
  %s8 = inlined_call_operand.vmem [shape: bf16[512,256], index: 8, kind: input, shape index: {}]
  %s9 = inlined_call_operand.vmem [shape: f32[1,256], index: 9, kind: input, shape index: {}]
  %s10 = inlined_call_operand.vmem [shape: f32[3,1], index: 10, kind: input, shape index: {}]
  %s11 = inlined_call_operand.vmem [shape: f32[3,1], index: 11, kind: input, shape index: {}]
  %s12 = inlined_call_operand.vmem [shape: bf16[256,128], index: 12, kind: input, shape index: {}]
  %s13 = inlined_call_operand.vmem [shape: f32[3,1], index: 13, kind: input, shape index: {}]
  %s14 = inlined_call_operand.vmem [shape: f32[1,128], index: 14, kind: input, shape index: {}]
  %s15 = inlined_call_operand.hbm [shape: f32[2,1,4], index: 15, kind: output, shape index: {0}]
  %s16 = inlined_call_operand.hbm [shape: f32[2,1,4], index: 16, kind: output, shape index: {1}]
  %17 = xla_tuple %s15, %s16
  %s18 = sld [smem:[#allocation0]]
  $region101: #{metar_forward.1} parent=0
    _
  %s20 = ssub.s32 1, %s18
  %s21 = scalar_select 0, %s20, %s18
  $region1: #{metar_forward.1} parent=0
    #allocation2 [shape = 'u8[1024]{0}', space=vmem, size = 0x400, scoped, tag = 'output window, operand 0']
    #allocation3 [shape = 's32[2]{0}', space=sflag, size = 0x8, scoped, tag = 'scoped memory for metar_forward.1']
    #allocation4 [shape = 'u8[1024]{0}', space=vmem, size = 0x400, scoped, tag = 'output window, operand 1']
    #allocation5 [shape = 's32[2]{0}', space=sflag, size = 0x8, scoped, tag = 'scoped memory for metar_forward.1']
    %22 = vsyncpa [#allocation3], 0
    %s23 = scalar_lea.sflag [#allocation3], 1
    %24 = vsyncpa %s23, 0
    %25 = vsyncpa [#allocation5], 0
    %s26 = scalar_lea.sflag [#allocation5], 1
    %27 = vsyncpa %s26, 0
    loop: start=0, step=1, limit=4
    $region2: #{metar_forward.1} parent=1 // loop_pre_header
      _
    $region3: #{metar_forward.1} parent=1 // loop_header
      %s29 = sphi 0, %s33
      %p30 = scmp.ge.s32.totalorder %s29, 4
      %s39 = sphi 0, %s41
      %s42 = sphi 0, %s39
      %s43 = sphi 0, %s42
      %s59 = sphi 0, %s43
      %s65 = sphi 0, %s67
      %s68 = sphi 0, %s65
      %s69 = sphi 0, %s68
      %s85 = sphi 0, %s69
      %s91 = sphi 0, %s93
      %s94 = sphi 0, %s91
      %s95 = sphi 0, %s94
      %s111 = sphi 0, %s95
      %s117 = sphi 0, %s119
      %s120 = sphi 0, %s117
      %s121 = sphi 0, %s120
      %s137 = sphi 0, %s121
      %s141 = sphi 0, %s141
      %s143 = sphi 0, %s141
      %s144 = sphi 0, %s143
      %s158 = sphi 0, %s144
      %s162 = sphi 0, %s162
      %s164 = sphi 0, %s162
      %s165 = sphi 0, %s164
      %s179 = sphi 0, %s165
      %s183 = sphi 0, %s183
      %s185 = sphi 0, %s183
      %s186 = sphi 0, %s185
      %s200 = sphi 0, %s186
      %s204 = sphi 0, %s204
      %s206 = sphi 0, %s204
      %s207 = sphi 0, %s206
      %s221 = sphi 0, %s207
      %s225 = sphi 0, %s225
      %s227 = sphi 0, %s225
      %s228 = sphi 0, %s227
      %s242 = sphi 0, %s228
      %s246 = sphi 0, %s246
      %s248 = sphi 0, %s246
      %s249 = sphi 0, %s248
      %s263 = sphi 0, %s249
      %s267 = sphi 0, %s267
      %s269 = sphi 0, %s267
      %s270 = sphi 0, %s269
      %s284 = sphi 0, %s270
      %s288 = sphi 0, %s288
      %s290 = sphi 0, %s288
      %s291 = sphi 0, %s290
      %s305 = sphi 0, %s291
      %s309 = sphi 0, %s309
      %s311 = sphi 0, %s309
      %s312 = sphi 0, %s311
      %s326 = sphi 0, %s312
      %s330 = sphi 0, %s330
      %s332 = sphi 0, %s330
      %s333 = sphi 0, %s332
      %s347 = sphi 0, %s333
      %s351 = sphi 0, %s351
      %s353 = sphi 0, %s351
      %s354 = sphi 0, %s353
      %s368 = sphi 0, %s354
      %s374 = sphi 0, %s376
      %s377 = sphi 0, %s374
      %s378 = sphi 0, %s377
      %s394 = sphi 0, %s378
      %s400 = sphi 0, %s402
      %s403 = sphi 0, %s400
      %s404 = sphi 0, %s403
      %s420 = sphi 0, %s404
    $region4: #{metar_forward.1} parent=1 // loop_header_branch
      %32 = sbr.rel (%p30) target = $region8
    $region5: #{metar_forward.1} parent=1 // loop_body
      %s34 = ssub.s32 %s29, 1
      %s35 = ssub.s32 %s29, 2
      %s36 = sadd.s32 %s29, 1
      %s37 = ssub.s32 %s29, %s36
      %p38 = scmp.eq.s32.totalorder %s37, 0
      %s40 = sadd.s32 %s39, 1
      %s41 = scalar_select %p38, %s39, %s40
      %p44 = pneg %p38
      %p45 = scmp.eq.s32.totalorder %s29, 1
      %p46 = por %p44, %p45
      %p47 = scmp.ne.s32.totalorder %s39, %s42
      %p48 = scmp.eq.s32.totalorder %s29, 0
      %p49 = por %p47, %p48
      %p50 = scmp.ne.s32.totalorder %s39, %s42
      %p51 = scmp.eq.s32.totalorder %s34, 1
      %p52 = por %p50, %p51
      %p53 = scmp.ne.s32.totalorder %s42, %s43
      %p54 = scmp.eq.s32.totalorder %s34, 0
      %p55 = por %p53, %p54
      %p56 = scmp.ne.s32.totalorder %s42, %s43
      %p57 = scmp.eq.s32.totalorder %s35, 1
      %p58 = por %p56, %p57
      %p60 = scmp.ne.s32.totalorder %s43, %s59
      %p61 = scmp.eq.s32.totalorder %s35, 0
      %p62 = por %p60, %p61
      %s63 = ssub.s32 %s29, %s36
      %p64 = scmp.eq.s32.totalorder %s63, 0
      %s66 = sadd.s32 %s65, 1
      %s67 = scalar_select %p64, %s65, %s66
      %p70 = pneg %p64
      %p71 = scmp.eq.s32.totalorder %s29, 1
      %p72 = por %p70, %p71
      %p73 = scmp.ne.s32.totalorder %s65, %s68
      %p74 = scmp.eq.s32.totalorder %s29, 0
      %p75 = por %p73, %p74
      %p76 = scmp.ne.s32.totalorder %s65, %s68
      %p77 = scmp.eq.s32.totalorder %s34, 1
      %p78 = por %p76, %p77
      %p79 = scmp.ne.s32.totalorder %s68, %s69
      %p80 = scmp.eq.s32.totalorder %s34, 0
      %p81 = por %p79, %p80
      %p82 = scmp.ne.s32.totalorder %s68, %s69
      %p83 = scmp.eq.s32.totalorder %s35, 1
      %p84 = por %p82, %p83
      %p86 = scmp.ne.s32.totalorder %s69, %s85
      %p87 = scmp.eq.s32.totalorder %s35, 0
      %p88 = por %p86, %p87
      %s89 = ssub.s32 %s29, %s36
      %p90 = scmp.eq.s32.totalorder %s89, 0
      %s92 = sadd.s32 %s91, 1
      %s93 = scalar_select %p90, %s91, %s92
      %p96 = pneg %p90
      %p97 = scmp.eq.s32.totalorder %s29, 1
      %p98 = por %p96, %p97
      %p99 = scmp.ne.s32.totalorder %s91, %s94
      %p100 = scmp.eq.s32.totalorder %s29, 0
      %p101 = por %p99, %p100
      %p102 = scmp.ne.s32.totalorder %s91, %s94
      %p103 = scmp.eq.s32.totalorder %s34, 1
      %p104 = por %p102, %p103
      %p105 = scmp.ne.s32.totalorder %s94, %s95
      %p106 = scmp.eq.s32.totalorder %s34, 0
      %p107 = por %p105, %p106
      %p108 = scmp.ne.s32.totalorder %s94, %s95
      %p109 = scmp.eq.s32.totalorder %s35, 1
      %p110 = por %p108, %p109
      %p112 = scmp.ne.s32.totalorder %s95, %s111
      %p113 = scmp.eq.s32.totalorder %s35, 0
      %p114 = por %p112, %p113
      %s115 = ssub.s32 %s29, %s36
      %p116 = scmp.eq.s32.totalorder %s115, 0
      %s118 = sadd.s32 %s117, 1
      %s119 = scalar_select %p116, %s117, %s118
      %p122 = pneg %p116
      %p123 = scmp.eq.s32.totalorder %s29, 1
      %p124 = por %p122, %p123
      %p125 = scmp.ne.s32.totalorder %s117, %s120
      %p126 = scmp.eq.s32.totalorder %s29, 0
      %p127 = por %p125, %p126
      %p128 = scmp.ne.s32.totalorder %s117, %s120
      %p129 = scmp.eq.s32.totalorder %s34, 1
      %p130 = por %p128, %p129
      %p131 = scmp.ne.s32.totalorder %s120, %s121
      %p132 = scmp.eq.s32.totalorder %s34, 0
      %p133 = por %p131, %p132
      %p134 = scmp.ne.s32.totalorder %s120, %s121
      %p135 = scmp.eq.s32.totalorder %s35, 1
      %p136 = por %p134, %p135
      %p138 = scmp.ne.s32.totalorder %s121, %s137
      %p139 = scmp.eq.s32.totalorder %s35, 0
      %p140 = por %p138, %p139
      %s142 = sadd.s32 %s141, 1
      %p145 = scmp.eq.s32.totalorder %s29, 1
      %p146 = scmp.ne.s32.totalorder %s141, %s143
      %p147 = scmp.eq.s32.totalorder %s29, 0
      %p148 = por %p146, %p147
      %p149 = scmp.ne.s32.totalorder %s141, %s143
      %p150 = scmp.eq.s32.totalorder %s34, 1
      %p151 = por %p149, %p150
      %p152 = scmp.ne.s32.totalorder %s143, %s144
      %p153 = scmp.eq.s32.totalorder %s34, 0
      %p154 = por %p152, %p153
      %p155 = scmp.ne.s32.totalorder %s143, %s144
      %p156 = scmp.eq.s32.totalorder %s35, 1
      %p157 = por %p155, %p156
      %p159 = scmp.ne.s32.totalorder %s144, %s158
      %p160 = scmp.eq.s32.totalorder %s35, 0
      %p161 = por %p159, %p160
      %s163 = sadd.s32 %s162, 1
      %p166 = scmp.eq.s32.totalorder %s29, 1
      %p167 = scmp.ne.s32.totalorder %s162, %s164
      %p168 = scmp.eq.s32.totalorder %s29, 0
      %p169 = por %p167, %p168
      %p170 = scmp.ne.s32.totalorder %s162, %s164
      %p171 = scmp.eq.s32.totalorder %s34, 1
      %p172 = por %p170, %p171
      %p173 = scmp.ne.s32.totalorder %s164, %s165
      %p174 = scmp.eq.s32.totalorder %s34, 0
      %p175 = por %p173, %p174
      %p176 = scmp.ne.s32.totalorder %s164, %s165
      %p177 = scmp.eq.s32.totalorder %s35, 1
      %p178 = por %p176, %p177
      %p180 = scmp.ne.s32.totalorder %s165, %s179
      %p181 = scmp.eq.s32.totalorder %s35, 0
      %p182 = por %p180, %p181
      %s184 = sadd.s32 %s183, 1
      %p187 = scmp.eq.s32.totalorder %s29, 1
      %p188 = scmp.ne.s32.totalorder %s183, %s185
      %p189 = scmp.eq.s32.totalorder %s29, 0
      %p190 = por %p188, %p189
      %p191 = scmp.ne.s32.totalorder %s183, %s185
      %p192 = scmp.eq.s32.totalorder %s34, 1
      %p193 = por %p191, %p192
      %p194 = scmp.ne.s32.totalorder %s185, %s186
      %p195 = scmp.eq.s32.totalorder %s34, 0
      %p196 = por %p194, %p195
      %p197 = scmp.ne.s32.totalorder %s185, %s186
      %p198 = scmp.eq.s32.totalorder %s35, 1
      %p199 = por %p197, %p198
      %p201 = scmp.ne.s32.totalorder %s186, %s200
      %p202 = scmp.eq.s32.totalorder %s35, 0
      %p203 = por %p201, %p202
      %s205 = sadd.s32 %s204, 1
      %p208 = scmp.eq.s32.totalorder %s29, 1
      %p209 = scmp.ne.s32.totalorder %s204, %s206
      %p210 = scmp.eq.s32.totalorder %s29, 0
      %p211 = por %p209, %p210
      %p212 = scmp.ne.s32.totalorder %s204, %s206
      %p213 = scmp.eq.s32.totalorder %s34, 1
      %p214 = por %p212, %p213
      %p215 = scmp.ne.s32.totalorder %s206, %s207
      %p216 = scmp.eq.s32.totalorder %s34, 0
      %p217 = por %p215, %p216
      %p218 = scmp.ne.s32.totalorder %s206, %s207
      %p219 = scmp.eq.s32.totalorder %s35, 1
      %p220 = por %p218, %p219
      %p222 = scmp.ne.s32.totalorder %s207, %s221
      %p223 = scmp.eq.s32.totalorder %s35, 0
      %p224 = por %p222, %p223
      %s226 = sadd.s32 %s225, 1
      %p229 = scmp.eq.s32.totalorder %s29, 1
      %p230 = scmp.ne.s32.totalorder %s225, %s227
      %p231 = scmp.eq.s32.totalorder %s29, 0
      %p232 = por %p230, %p231
      %p233 = scmp.ne.s32.totalorder %s225, %s227
      %p234 = scmp.eq.s32.totalorder %s34, 1
      %p235 = por %p233, %p234
      %p236 = scmp.ne.s32.totalorder %s227, %s228
      %p237 = scmp.eq.s32.totalorder %s34, 0
      %p238 = por %p236, %p237
      %p239 = scmp.ne.s32.totalorder %s227, %s228
      %p240 = scmp.eq.s32.totalorder %s35, 1
      %p241 = por %p239, %p240
      %p243 = scmp.ne.s32.totalorder %s228, %s242
      %p244 = scmp.eq.s32.totalorder %s35, 0
      %p245 = por %p243, %p244
      %s247 = sadd.s32 %s246, 1
      %p250 = scmp.eq.s32.totalorder %s29, 1
      %p251 = scmp.ne.s32.totalorder %s246, %s248
      %p252 = scmp.eq.s32.totalorder %s29, 0
      %p253 = por %p251, %p252
      %p254 = scmp.ne.s32.totalorder %s246, %s248
      %p255 = scmp.eq.s32.totalorder %s34, 1
      %p256 = por %p254, %p255
      %p257 = scmp.ne.s32.totalorder %s248, %s249
      %p258 = scmp.eq.s32.totalorder %s34, 0
      %p259 = por %p257, %p258
      %p260 = scmp.ne.s32.totalorder %s248, %s249
      %p261 = scmp.eq.s32.totalorder %s35, 1
      %p262 = por %p260, %p261
      %p264 = scmp.ne.s32.totalorder %s249, %s263
      %p265 = scmp.eq.s32.totalorder %s35, 0
      %p266 = por %p264, %p265
      %s268 = sadd.s32 %s267, 1
      %p271 = scmp.eq.s32.totalorder %s29, 1
      %p272 = scmp.ne.s32.totalorder %s267, %s269
      %p273 = scmp.eq.s32.totalorder %s29, 0
      %p274 = por %p272, %p273
      %p275 = scmp.ne.s32.totalorder %s267, %s269
      %p276 = scmp.eq.s32.totalorder %s34, 1
      %p277 = por %p275, %p276
      %p278 = scmp.ne.s32.totalorder %s269, %s270
      %p279 = scmp.eq.s32.totalorder %s34, 0
      %p280 = por %p278, %p279
      %p281 = scmp.ne.s32.totalorder %s269, %s270
      %p282 = scmp.eq.s32.totalorder %s35, 1
      %p283 = por %p281, %p282
      %p285 = scmp.ne.s32.totalorder %s270, %s284
      %p286 = scmp.eq.s32.totalorder %s35, 0
      %p287 = por %p285, %p286
      %s289 = sadd.s32 %s288, 1
      %p292 = scmp.eq.s32.totalorder %s29, 1
      %p293 = scmp.ne.s32.totalorder %s288, %s290
      %p294 = scmp.eq.s32.totalorder %s29, 0
      %p295 = por %p293, %p294
      %p296 = scmp.ne.s32.totalorder %s288, %s290
      %p297 = scmp.eq.s32.totalorder %s34, 1
      %p298 = por %p296, %p297
      %p299 = scmp.ne.s32.totalorder %s290, %s291
      %p300 = scmp.eq.s32.totalorder %s34, 0
      %p301 = por %p299, %p300
      %p302 = scmp.ne.s32.totalorder %s290, %s291
      %p303 = scmp.eq.s32.totalorder %s35, 1
      %p304 = por %p302, %p303
      %p306 = scmp.ne.s32.totalorder %s291, %s305
      %p307 = scmp.eq.s32.totalorder %s35, 0
      %p308 = por %p306, %p307
      %s310 = sadd.s32 %s309, 1
      %p313 = scmp.eq.s32.totalorder %s29, 1
      %p314 = scmp.ne.s32.totalorder %s309, %s311
      %p315 = scmp.eq.s32.totalorder %s29, 0
      %p316 = por %p314, %p315
      %p317 = scmp.ne.s32.totalorder %s309, %s311
      %p318 = scmp.eq.s32.totalorder %s34, 1
      %p319 = por %p317, %p318
      %p320 = scmp.ne.s32.totalorder %s311, %s312
      %p321 = scmp.eq.s32.totalorder %s34, 0
      %p322 = por %p320, %p321
      %p323 = scmp.ne.s32.totalorder %s311, %s312
      %p324 = scmp.eq.s32.totalorder %s35, 1
      %p325 = por %p323, %p324
      %p327 = scmp.ne.s32.totalorder %s312, %s326
      %p328 = scmp.eq.s32.totalorder %s35, 0
      %p329 = por %p327, %p328
      %s331 = sadd.s32 %s330, 1
      %p334 = scmp.eq.s32.totalorder %s29, 1
      %p335 = scmp.ne.s32.totalorder %s330, %s332
      %p336 = scmp.eq.s32.totalorder %s29, 0
      %p337 = por %p335, %p336
      %p338 = scmp.ne.s32.totalorder %s330, %s332
      %p339 = scmp.eq.s32.totalorder %s34, 1
      %p340 = por %p338, %p339
      %p341 = scmp.ne.s32.totalorder %s332, %s333
      %p342 = scmp.eq.s32.totalorder %s34, 0
      %p343 = por %p341, %p342
      %p344 = scmp.ne.s32.totalorder %s332, %s333
      %p345 = scmp.eq.s32.totalorder %s35, 1
      %p346 = por %p344, %p345
      %p348 = scmp.ne.s32.totalorder %s333, %s347
      %p349 = scmp.eq.s32.totalorder %s35, 0
      %p350 = por %p348, %p349
      %s352 = sadd.s32 %s351, 1
      %p355 = scmp.eq.s32.totalorder %s29, 1
      %p356 = scmp.ne.s32.totalorder %s351, %s353
      %p357 = scmp.eq.s32.totalorder %s29, 0
      %p358 = por %p356, %p357
      %p359 = scmp.ne.s32.totalorder %s351, %s353
      %p360 = scmp.eq.s32.totalorder %s34, 1
      %p361 = por %p359, %p360
      %p362 = scmp.ne.s32.totalorder %s353, %s354
      %p363 = scmp.eq.s32.totalorder %s34, 0
      %p364 = por %p362, %p363
      %p365 = scmp.ne.s32.totalorder %s353, %s354
      %p366 = scmp.eq.s32.totalorder %s35, 1
      %p367 = por %p365, %p366
      %p369 = scmp.ne.s32.totalorder %s354, %s368
      %p370 = scmp.eq.s32.totalorder %s35, 0
      %p371 = por %p369, %p370
      %s372 = ssub.s32 %s29, %s36
      %p373 = scmp.eq.s32.totalorder %s372, 0
      %s375 = sadd.s32 %s374, 1
      %s376 = scalar_select %p373, %s374, %s375
      %p379 = pneg %p373
      %p380 = scmp.eq.s32.totalorder %s29, 1
      %p381 = por %p379, %p380
      %p382 = scmp.ne.s32.totalorder %s374, %s377
      %p383 = scmp.eq.s32.totalorder %s29, 0
      %p384 = por %p382, %p383
      %p385 = scmp.ne.s32.totalorder %s374, %s377
      %p386 = scmp.eq.s32.totalorder %s34, 1
      %p387 = por %p385, %p386
      %p388 = scmp.ne.s32.totalorder %s377, %s378
      %p389 = scmp.eq.s32.totalorder %s34, 0
      %p390 = por %p388, %p389
      %p391 = scmp.ne.s32.totalorder %s377, %s378
      %p392 = scmp.eq.s32.totalorder %s35, 1
      %p393 = por %p391, %p392
      %p395 = scmp.ne.s32.totalorder %s378, %s394
      %p396 = scmp.eq.s32.totalorder %s35, 0
      %p397 = por %p395, %p396
      %s398 = ssub.s32 %s29, %s36
      %p399 = scmp.eq.s32.totalorder %s398, 0
      %s401 = sadd.s32 %s400, 1
      %s402 = scalar_select %p399, %s400, %s401
      %p405 = pneg %p399
      %p406 = scmp.eq.s32.totalorder %s29, 1
      %p407 = por %p405, %p406
      %p408 = scmp.ne.s32.totalorder %s400, %s403
      %p409 = scmp.eq.s32.totalorder %s29, 0
      %p410 = por %p408, %p409
      %p411 = scmp.ne.s32.totalorder %s400, %s403
      %p412 = scmp.eq.s32.totalorder %s34, 1
      %p413 = por %p411, %p412
      %p414 = scmp.ne.s32.totalorder %s403, %s404
      %p415 = scmp.eq.s32.totalorder %s34, 0
      %p416 = por %p414, %p415
      %p417 = scmp.ne.s32.totalorder %s403, %s404
      %p418 = scmp.eq.s32.totalorder %s35, 1
      %p419 = por %p417, %p418
      %p421 = scmp.ne.s32.totalorder %s404, %s420
      %p422 = scmp.eq.s32.totalorder %s35, 0
      %p423 = por %p421, %p422
      %p424 = scmp.le.s32.totalorder 1, %s29
      %p425 = scmp.lt.s32.totalorder %s29, 3
      %p426 = pnand %p424, %p425
      %p427 = pneg %p426
      // Predicated region
      $region9: #{metar_forward.1} parent=5 // pred_check
        _
      $region10: #{metar_forward.1} parent=5 // pred_check_branch
        %429 = sbr.rel (%p426) target = $region12
      $region11: #{metar_forward.1} parent=5 // pred_region
        %s430 = ssub.s32 %s29, 1
        // Predicated region
        $region13: #{metar_forward.1} parent=11 // pred_check
          %p431 = pneg %p154
        $region14: #{metar_forward.1} parent=11 // pred_check_branch
          %433 = sbr.rel (%p431) target = $region16
        $region15: #{metar_forward.1} parent=11 // pred_region
          _
        $region16: #{metar_forward.1} parent=11 // pred_fallthru
          _
        // Predicated region
        $region17: #{metar_forward.1} parent=11 // pred_check
          %p434 = pneg %p175
        $region18: #{metar_forward.1} parent=11 // pred_check_branch
          %436 = sbr.rel (%p434) target = $region20
        $region19: #{metar_forward.1} parent=11 // pred_region
          _
        $region20: #{metar_forward.1} parent=11 // pred_fallthru
          _
        // Predicated region
        $region21: #{metar_forward.1} parent=11 // pred_check
          %p437 = pneg %p196
        $region22: #{metar_forward.1} parent=11 // pred_check_branch
          %439 = sbr.rel (%p437) target = $region24
        $region23: #{metar_forward.1} parent=11 // pred_region
          _
        $region24: #{metar_forward.1} parent=11 // pred_fallthru
          _
        // Predicated region
        $region25: #{metar_forward.1} parent=11 // pred_check
          %p440 = pneg %p217
        $region26: #{metar_forward.1} parent=11 // pred_check_branch
          %442 = sbr.rel (%p440) target = $region28
        $region27: #{metar_forward.1} parent=11 // pred_region
          _
        $region28: #{metar_forward.1} parent=11 // pred_fallthru
          _
        // Predicated region
        $region29: #{metar_forward.1} parent=11 // pred_check
          %p443 = pneg %p238
        $region30: #{metar_forward.1} parent=11 // pred_check_branch
          %445 = sbr.rel (%p443) target = $region32
        $region31: #{metar_forward.1} parent=11 // pred_region
          _
        $region32: #{metar_forward.1} parent=11 // pred_fallthru
          _
        // Predicated region
        $region33: #{metar_forward.1} parent=11 // pred_check
          %p446 = pneg %p259
        $region34: #{metar_forward.1} parent=11 // pred_check_branch
          %448 = sbr.rel (%p446) target = $region36
        $region35: #{metar_forward.1} parent=11 // pred_region
          _
        $region36: #{metar_forward.1} parent=11 // pred_fallthru
          _
        // Predicated region
        $region37: #{metar_forward.1} parent=11 // pred_check
          %p449 = pneg %p280
        $region38: #{metar_forward.1} parent=11 // pred_check_branch
          %451 = sbr.rel (%p449) target = $region40
        $region39: #{metar_forward.1} parent=11 // pred_region
          _
        $region40: #{metar_forward.1} parent=11 // pred_fallthru
          _
        // Predicated region
        $region41: #{metar_forward.1} parent=11 // pred_check
          %p452 = pneg %p301
        $region42: #{metar_forward.1} parent=11 // pred_check_branch
          %454 = sbr.rel (%p452) target = $region44
        $region43: #{metar_forward.1} parent=11 // pred_region
          _
        $region44: #{metar_forward.1} parent=11 // pred_fallthru
          _
        // Predicated region
        $region45: #{metar_forward.1} parent=11 // pred_check
          %p455 = pneg %p322
        $region46: #{metar_forward.1} parent=11 // pred_check_branch
          %457 = sbr.rel (%p455) target = $region48
        $region47: #{metar_forward.1} parent=11 // pred_region
          _
        $region48: #{metar_forward.1} parent=11 // pred_fallthru
          _
        // Predicated region
        $region49: #{metar_forward.1} parent=11 // pred_check
          %p458 = pneg %p343
        $region50: #{metar_forward.1} parent=11 // pred_check_branch
          %460 = sbr.rel (%p458) target = $region52
        $region51: #{metar_forward.1} parent=11 // pred_region
          _
        $region52: #{metar_forward.1} parent=11 // pred_fallthru
          _
        // Predicated region
        $region53: #{metar_forward.1} parent=11 // pred_check
          %p461 = pneg %p364
        $region54: #{metar_forward.1} parent=11 // pred_check_branch
          %463 = sbr.rel (%p461) target = $region56
        $region55: #{metar_forward.1} parent=11 // pred_region
          _
        $region56: #{metar_forward.1} parent=11 // pred_fallthru
          _
      $region12: #{metar_forward.1} parent=5 // pred_fallthru
        _
      %p464 = scmp.lt.s32.totalorder %s29, 2
      // Predicated region
      $region57: #{metar_forward.1} parent=5 // pred_check
        %p465 = pneg %p464
      $region58: #{metar_forward.1} parent=5 // pred_check_branch
        %467 = sbr.rel (%p465) target = $region60
      $region59: #{metar_forward.1} parent=5 // pred_region
        // Predicated region
        $region61: #{metar_forward.1} parent=59 // pred_check
          %p468 = pneg %p49
        $region62: #{metar_forward.1} parent=59 // pred_check_branch
          %470 = sbr.rel (%p468) target = $region64
        $region63: #{metar_forward.1} parent=59 // pred_region
          %p471 = scmp.lt.s32.totalorder %s29, 1
          %s472 = scalar_select %p471, %s29, 1
          %s473 = smul.addr %s472, 2
          %s474 = smul.addr %s473, 4
          %s475 = scalar_lea.vmem %s0, %s474
        $region64: #{metar_forward.1} parent=59 // pred_fallthru
          _
        // Predicated region
        $region65: #{metar_forward.1} parent=59 // pred_check
          %p476 = pneg %p75
        $region66: #{metar_forward.1} parent=59 // pred_check_branch
          %478 = sbr.rel (%p476) target = $region68
        $region67: #{metar_forward.1} parent=59 // pred_region
          %p479 = scmp.lt.s32.totalorder %s29, 1
          %s480 = scalar_select %p479, %s29, 1
          %s481 = smul.addr %s480, 2
          %s482 = smul.addr %s481, 4
          %s483 = scalar_lea.vmem %s1, %s482
        $region68: #{metar_forward.1} parent=59 // pred_fallthru
          _
        // Predicated region
        $region69: #{metar_forward.1} parent=59 // pred_check
          %p484 = pneg %p101
        $region70: #{metar_forward.1} parent=59 // pred_check_branch
          %486 = sbr.rel (%p484) target = $region72
        $region71: #{metar_forward.1} parent=59 // pred_region
          %p487 = scmp.lt.s32.totalorder %s29, 1
          %s488 = scalar_select %p487, %s29, 1
          %s489 = smul.addr %s488, 2
          %s490 = smul.addr %s489, 4
          %s491 = scalar_lea.vmem %s2, %s490
        $region72: #{metar_forward.1} parent=59 // pred_fallthru
          _
        // Predicated region
        $region73: #{metar_forward.1} parent=59 // pred_check
          %p492 = pneg %p127
        $region74: #{metar_forward.1} parent=59 // pred_check_branch
          %494 = sbr.rel (%p492) target = $region76
        $region75: #{metar_forward.1} parent=59 // pred_region
          %p495 = scmp.lt.s32.totalorder %s29, 1
          %s496 = scalar_select %p495, %s29, 1
          %s497 = smul.addr %s496, 2
          %s498 = smul.addr %s497, 4
          %s499 = scalar_lea.vmem %s3, %s498
        $region76: #{metar_forward.1} parent=59 // pred_fallthru
          _
      $region60: #{metar_forward.1} parent=5 // pred_fallthru
        _
      %p500 = scmp.le.s32.totalorder 1, %s29
      %p501 = scmp.lt.s32.totalorder %s29, 3
      %p502 = pnand %p500, %p501
      %p503 = pneg %p502
      // Predicated region
      $region77: #{metar_forward.1} parent=5 // pred_check
        _
      $region78: #{metar_forward.1} parent=5 // pred_check_branch
        %505 = sbr.rel (%p502) target = $region80
      $region79: #{metar_forward.1} parent=5 // pred_region
        %s506 = ssub.s32 %s29, 1
        %p507 = scmp.lt.s32.totalorder %s34, 1
        %s508 = scalar_select %p507, %s34, 1
        %s509 = smul.addr %s508, 2
        %s510 = smul.addr %s509, 4
        %s511 = scalar_lea.vmem %s0, %s510
        %p512 = pneg %p55
        %p513 = pneg %p52
        %p514 = scmp.lt.s32.totalorder %s34, 1
        %s515 = scalar_select %p514, %s34, 1
        %s516 = smul.addr %s515, 2
        %s517 = smul.addr %s516, 4
        %s518 = scalar_lea.vmem %s1, %s517
        %p519 = pneg %p81
        %p520 = pneg %p78
        %p521 = scmp.lt.s32.totalorder %s34, 1
        %s522 = scalar_select %p521, %s34, 1
        %s523 = smul.addr %s522, 2
        %s524 = smul.addr %s523, 4
        %s525 = scalar_lea.vmem %s2, %s524
        %p526 = pneg %p107
        %p527 = pneg %p104
        %p528 = scmp.lt.s32.totalorder %s34, 1
        %s529 = scalar_select %p528, %s34, 1
        %s530 = smul.addr %s529, 2
        %s531 = smul.addr %s530, 4
        %s532 = scalar_lea.vmem %s3, %s531
        %p533 = pneg %p133
        %p534 = pneg %p130
        %p535 = pneg %p154
        %p536 = pneg %p151
        %p537 = pneg %p175
        %p538 = pneg %p172
        %p539 = pneg %p196
        %p540 = pneg %p193
        %p541 = pneg %p217
        %p542 = pneg %p214
        %p543 = pneg %p238
        %p544 = pneg %p235
        %p545 = pneg %p259
        %p546 = pneg %p256
        %p547 = pneg %p280
        %p548 = pneg %p277
        %p549 = pneg %p301
        %p550 = pneg %p298
        %p551 = pneg %p322
        %p552 = pneg %p319
        %p553 = pneg %p343
        %p554 = pneg %p340
        %p555 = pneg %p364
        %p556 = pneg %p361
        %p557 = pneg %p390
        %p558 = pneg %p387
        %s559 = sand.u32 %s377, 1
        %s560 = scalar_lea.sflag [#allocation3], %s559
        %s561 = sand.u32 %s377, 1
        %s562 = scalar_lea.vmem [#allocation2], %s561
        %p563 = pneg %p416
        %p564 = pneg %p413
        %s565 = sand.u32 %s403, 1
        %s566 = scalar_lea.sflag [#allocation5], %s565
        %s567 = sand.u32 %s403, 1
        %s568 = scalar_lea.vmem [#allocation4], %s567
        %p569 = scmp.lt.s32.totalorder %s34, 1
        %s570 = scalar_select %p569, %s34, 1
        %s571 = smul.addr %s570, 2
        %s572 = smul.addr %s571, 4
        %s573 = scalar_lea.vmem %s0, %s572
        %p574 = scmp.lt.s32.totalorder %s34, 1
        %s575 = scalar_select %p574, %s34, 1
        %s576 = smul.addr %s575, 2
        %s577 = smul.addr %s576, 4
        %s578 = scalar_lea.vmem %s1, %s577
        %p579 = scmp.lt.s32.totalorder %s34, 1
        %s580 = scalar_select %p579, %s34, 1
        %s581 = smul.addr %s580, 2
        %s582 = smul.addr %s581, 4
        %s583 = scalar_lea.vmem %s2, %s582
        %p584 = scmp.lt.s32.totalorder %s34, 1
        %s585 = scalar_select %p584, %s34, 1
        %s586 = smul.addr %s585, 2
        %s587 = smul.addr %s586, 4
        %s588 = scalar_lea.vmem %s3, %s587
        %v590 = vld [vmem:[%s573] sm:$0x77]
        %v592 = vcombine.high %v590, %v590
        %v594 = vpack.c.bf16 %v590, %v590
        %v595 = vpack.c.bf16 %v592, %v592
        %v596 = vld [vmem:[%s4] sm:$0xff]
        %v597 = vld [vmem:[%s4 + $0x8] sm:$0xff]
        %v598 = vld [vmem:[%s4 + $0x10] sm:$0xff]
        %v599 = vld [vmem:[%s4 + $0x18] sm:$0xff]
        %v600 = vld [vmem:[%s4 + $0x20] sm:$0xff]
        %v601 = vld [vmem:[%s4 + $0x28] sm:$0xff]
        %v602 = vld [vmem:[%s4 + $0x30] sm:$0xff]
        %v603 = vld [vmem:[%s4 + $0x38] sm:$0xff]
        %v604 = vld [vmem:[%s4 + $0x40] sm:$0xff]
        %v605 = vld [vmem:[%s4 + $0x48] sm:$0xff]
        %v606 = vld [vmem:[%s4 + $0x50] sm:$0xff]
        %v607 = vld [vmem:[%s4 + $0x58] sm:$0xff]
        %v608 = vld [vmem:[%s4 + $0x60] sm:$0xff]
        %v609 = vld [vmem:[%s4 + $0x68] sm:$0xff]
        %v610 = vld [vmem:[%s4 + $0x70] sm:$0xff]
        %v611 = vld [vmem:[%s4 + $0x78] sm:$0xff]
        %v612 = vld [vmem:[%s4 + $0x80] sm:$0xff]
        %v613 = vld [vmem:[%s4 + $0x88] sm:$0xff]
        %v614 = vld [vmem:[%s4 + $0x90] sm:$0xff]
        %v615 = vld [vmem:[%s4 + $0x98] sm:$0xff]
        %v616 = vld [vmem:[%s4 + $0xa0] sm:$0xff]
        %v617 = vld [vmem:[%s4 + $0xa8] sm:$0xff]
        %v618 = vld [vmem:[%s4 + $0xb0] sm:$0xff]
        %v619 = vld [vmem:[%s4 + $0xb8] sm:$0xff]
        %v620 = vld [vmem:[%s4 + $0xc0] sm:$0xff]
        %v621 = vld [vmem:[%s4 + $0xc8] sm:$0xff]
        %v622 = vld [vmem:[%s4 + $0xd0] sm:$0xff]
        %v623 = vld [vmem:[%s4 + $0xd8] sm:$0xff]
        %v624 = vld [vmem:[%s4 + $0xe0] sm:$0xff]
        %v625 = vld [vmem:[%s4 + $0xe8] sm:$0xff]
        %v626 = vld [vmem:[%s4 + $0xf0] sm:$0xff]
        %v627 = vld [vmem:[%s4 + $0xf8] sm:$0xff]
        %v628 = vld [vmem:[%s4 + $0x100] sm:$0xff]
        %v629 = vld [vmem:[%s4 + $0x108] sm:$0xff]
        %v630 = vld [vmem:[%s4 + $0x110] sm:$0xff]
        %v631 = vld [vmem:[%s4 + $0x118] sm:$0xff]
        %v632 = vld [vmem:[%s4 + $0x120] sm:$0xff]
        %v633 = vld [vmem:[%s4 + $0x128] sm:$0xff]
        %v634 = vld [vmem:[%s4 + $0x130] sm:$0xff]
        %v635 = vld [vmem:[%s4 + $0x138] sm:$0xff]
        %v636 = vld [vmem:[%s4 + $0x140] sm:$0xff]
        %v637 = vld [vmem:[%s4 + $0x148] sm:$0xff]
        %v638 = vld [vmem:[%s4 + $0x150] sm:$0xff]
        %v639 = vld [vmem:[%s4 + $0x158] sm:$0xff]
        %v640 = vld [vmem:[%s4 + $0x160] sm:$0xff]
        %v641 = vld [vmem:[%s4 + $0x168] sm:$0xff]
        %v642 = vld [vmem:[%s4 + $0x170] sm:$0xff]
        %v643 = vld [vmem:[%s4 + $0x178] sm:$0xff]
        %v644 = vld [vmem:[%s4 + $0x180] sm:$0xff]
        %v645 = vld [vmem:[%s4 + $0x188] sm:$0xff]
        %v646 = vld [vmem:[%s4 + $0x190] sm:$0xff]
        %v647 = vld [vmem:[%s4 + $0x198] sm:$0xff]
        %v648 = vld [vmem:[%s4 + $0x1a0] sm:$0xff]
        %v649 = vld [vmem:[%s4 + $0x1a8] sm:$0xff]
        %v650 = vld [vmem:[%s4 + $0x1b0] sm:$0xff]
        %v651 = vld [vmem:[%s4 + $0x1b8] sm:$0xff]
        %v652 = vld [vmem:[%s4 + $0x1c0] sm:$0xff]
        %v653 = vld [vmem:[%s4 + $0x1c8] sm:$0xff]
        %v654 = vld [vmem:[%s4 + $0x1d0] sm:$0xff]
        %v655 = vld [vmem:[%s4 + $0x1d8] sm:$0xff]
        %v656 = vld [vmem:[%s4 + $0x1e0] sm:$0xff]
        %v657 = vld [vmem:[%s4 + $0x1e8] sm:$0xff]
        %v658 = vld [vmem:[%s4 + $0x1f0] sm:$0xff]
        %v659 = vld [vmem:[%s4 + $0x1f8] sm:$0xff]
        %v660 = vld [vmem:[%s5] sm:$0xf]
        %v662 = vlaneseq
        %v663 = vshrl.u32 %v662, 7
        %v664 = vsub.s32 0, %v663
        %v665 = vrot.slane %v660, %v664
        %v666 = vlaneseq
        %v667 = vshrl.u32 %v666, 7
        %v668 = vsub.s32 1, %v667
        %v669 = vrot.slane %v660, %v668
        %v670 = vlaneseq
        %v671 = vshrl.u32 %v670, 7
        %v672 = vsub.s32 2, %v671
        %v673 = vrot.slane %v660, %v672
        %v674 = vlaneseq
        %v675 = vshrl.u32 %v674, 7
        %v676 = vsub.s32 3, %v675
        %v677 = vrot.slane %v660, %v676
        %v746 = vunpack.c.l.b16 %v596
        %v747 = vunpack.c.h.b16 %v596
        %v748 = vunpack.c.l.b16 %v597
        %v749 = vunpack.c.h.b16 %v597
        %v750 = vunpack.c.l.b16 %v598
        %v751 = vunpack.c.h.b16 %v598
        %v752 = vunpack.c.l.b16 %v599
        %v753 = vunpack.c.h.b16 %v599
        %v754 = vunpack.c.l.b16 %v600
        %v755 = vunpack.c.h.b16 %v600
        %v756 = vunpack.c.l.b16 %v601
        %v757 = vunpack.c.h.b16 %v601
        %v758 = vunpack.c.l.b16 %v602
        %v759 = vunpack.c.h.b16 %v602
        %v760 = vunpack.c.l.b16 %v603
        %v761 = vunpack.c.h.b16 %v603
        %v762 = vunpack.c.l.b16 %v604
        %v763 = vunpack.c.h.b16 %v604
        %v764 = vunpack.c.l.b16 %v605
        %v765 = vunpack.c.h.b16 %v605
        %v766 = vunpack.c.l.b16 %v606
        %v767 = vunpack.c.h.b16 %v606
        %v768 = vunpack.c.l.b16 %v607
        %v769 = vunpack.c.h.b16 %v607
        %v770 = vunpack.c.l.b16 %v608
        %v771 = vunpack.c.h.b16 %v608
        %v772 = vunpack.c.l.b16 %v609
        %v773 = vunpack.c.h.b16 %v609
        %v774 = vunpack.c.l.b16 %v610
        %v775 = vunpack.c.h.b16 %v610
        %v776 = vunpack.c.l.b16 %v611
        %v777 = vunpack.c.h.b16 %v611
        %v778 = vunpack.c.l.b16 %v612
        %v779 = vunpack.c.h.b16 %v612
        %v780 = vunpack.c.l.b16 %v613
        %v781 = vunpack.c.h.b16 %v613
        %v782 = vunpack.c.l.b16 %v614
        %v783 = vunpack.c.h.b16 %v614
        %v784 = vunpack.c.l.b16 %v615
        %v785 = vunpack.c.h.b16 %v615
        %v786 = vunpack.c.l.b16 %v616
        %v787 = vunpack.c.h.b16 %v616
        %v788 = vunpack.c.l.b16 %v617
        %v789 = vunpack.c.h.b16 %v617
        %v790 = vunpack.c.l.b16 %v618
        %v791 = vunpack.c.h.b16 %v618
        %v792 = vunpack.c.l.b16 %v619
        %v793 = vunpack.c.h.b16 %v619
        %v794 = vunpack.c.l.b16 %v620
        %v795 = vunpack.c.h.b16 %v620
        %v796 = vunpack.c.l.b16 %v621
        %v797 = vunpack.c.h.b16 %v621
        %v798 = vunpack.c.l.b16 %v622
        %v799 = vunpack.c.h.b16 %v622
        %v800 = vunpack.c.l.b16 %v623
        %v801 = vunpack.c.h.b16 %v623
        %v802 = vunpack.c.l.b16 %v624
        %v803 = vunpack.c.h.b16 %v624
        %v804 = vunpack.c.l.b16 %v625
        %v805 = vunpack.c.h.b16 %v625
        %v806 = vunpack.c.l.b16 %v626
        %v807 = vunpack.c.h.b16 %v626
        %v808 = vunpack.c.l.b16 %v627
        %v809 = vunpack.c.h.b16 %v627
        %v810 = vunpack.c.l.b16 %v628
        %v811 = vunpack.c.h.b16 %v628
        %v812 = vunpack.c.l.b16 %v629
        %v813 = vunpack.c.h.b16 %v629
        %v814 = vunpack.c.l.b16 %v630
        %v815 = vunpack.c.h.b16 %v630
        %v816 = vunpack.c.l.b16 %v631
        %v817 = vunpack.c.h.b16 %v631
        %v818 = vunpack.c.l.b16 %v632
        %v819 = vunpack.c.h.b16 %v632
        %v820 = vunpack.c.l.b16 %v633
        %v821 = vunpack.c.h.b16 %v633
        %v822 = vunpack.c.l.b16 %v634
        %v823 = vunpack.c.h.b16 %v634
        %v824 = vunpack.c.l.b16 %v635
        %v825 = vunpack.c.h.b16 %v635
        %v826 = vunpack.c.l.b16 %v636
        %v827 = vunpack.c.h.b16 %v636
        %v828 = vunpack.c.l.b16 %v637
        %v829 = vunpack.c.h.b16 %v637
        %v830 = vunpack.c.l.b16 %v638
        %v831 = vunpack.c.h.b16 %v638
        %v832 = vunpack.c.l.b16 %v639
        %v833 = vunpack.c.h.b16 %v639
        %v834 = vunpack.c.l.b16 %v640
        %v835 = vunpack.c.h.b16 %v640
        %v836 = vunpack.c.l.b16 %v641
        %v837 = vunpack.c.h.b16 %v641
        %v838 = vunpack.c.l.b16 %v642
        %v839 = vunpack.c.h.b16 %v642
        %v840 = vunpack.c.l.b16 %v643
        %v841 = vunpack.c.h.b16 %v643
        %v842 = vunpack.c.l.b16 %v644
        %v843 = vunpack.c.h.b16 %v644
        %v844 = vunpack.c.l.b16 %v645
        %v845 = vunpack.c.h.b16 %v645
        %v846 = vunpack.c.l.b16 %v646
        %v847 = vunpack.c.h.b16 %v646
        %v848 = vunpack.c.l.b16 %v647
        %v849 = vunpack.c.h.b16 %v647
        %v850 = vunpack.c.l.b16 %v648
        %v851 = vunpack.c.h.b16 %v648
        %v852 = vunpack.c.l.b16 %v649
        %v853 = vunpack.c.h.b16 %v649
        %v854 = vunpack.c.l.b16 %v650
        %v855 = vunpack.c.h.b16 %v650
        %v856 = vunpack.c.l.b16 %v651
        %v857 = vunpack.c.h.b16 %v651
        %v858 = vunpack.c.l.b16 %v652
        %v859 = vunpack.c.h.b16 %v652
        %v860 = vunpack.c.l.b16 %v653
        %v861 = vunpack.c.h.b16 %v653
        %v862 = vunpack.c.l.b16 %v654
        %v863 = vunpack.c.h.b16 %v654
        %v864 = vunpack.c.l.b16 %v655
        %v865 = vunpack.c.h.b16 %v655
        %v866 = vunpack.c.l.b16 %v656
        %v867 = vunpack.c.h.b16 %v656
        %v868 = vunpack.c.l.b16 %v657
        %v869 = vunpack.c.h.b16 %v657
        %v870 = vunpack.c.l.b16 %v658
        %v871 = vunpack.c.h.b16 %v658
        %v872 = vunpack.c.l.b16 %v659
        %v873 = vunpack.c.h.b16 %v659
        %v874 = vpack.c.b16 %v750, %v746
        %v875 = vpack.c.b16 %v751, %v747
        %v876 = vpack.c.b16 %v752, %v748
        %v877 = vpack.c.b16 %v753, %v749
        %v878 = vpack.c.b16 %v758, %v754
        %v879 = vpack.c.b16 %v759, %v755
        %v880 = vpack.c.b16 %v760, %v756
        %v881 = vpack.c.b16 %v761, %v757
        %v882 = vpack.c.b16 %v766, %v762
        %v883 = vpack.c.b16 %v767, %v763
        %v884 = vpack.c.b16 %v768, %v764
        %v885 = vpack.c.b16 %v769, %v765
        %v886 = vpack.c.b16 %v774, %v770
        %v887 = vpack.c.b16 %v775, %v771
        %v888 = vpack.c.b16 %v776, %v772
        %v889 = vpack.c.b16 %v777, %v773
        %v890 = vpack.c.b16 %v782, %v778
        %v891 = vpack.c.b16 %v783, %v779
        %v892 = vpack.c.b16 %v784, %v780
        %v893 = vpack.c.b16 %v785, %v781
        %v894 = vpack.c.b16 %v790, %v786
        %v895 = vpack.c.b16 %v791, %v787
        %v896 = vpack.c.b16 %v792, %v788
        %v897 = vpack.c.b16 %v793, %v789
        %v898 = vpack.c.b16 %v798, %v794
        %v899 = vpack.c.b16 %v799, %v795
        %v900 = vpack.c.b16 %v800, %v796
        %v901 = vpack.c.b16 %v801, %v797
        %v902 = vpack.c.b16 %v806, %v802
        %v903 = vpack.c.b16 %v807, %v803
        %v904 = vpack.c.b16 %v808, %v804
        %v905 = vpack.c.b16 %v809, %v805
        %v906 = vpack.c.b16 %v814, %v810
        %v907 = vpack.c.b16 %v815, %v811
        %v908 = vpack.c.b16 %v816, %v812
        %v909 = vpack.c.b16 %v817, %v813
        %v910 = vpack.c.b16 %v822, %v818
        %v911 = vpack.c.b16 %v823, %v819
        %v912 = vpack.c.b16 %v824, %v820
        %v913 = vpack.c.b16 %v825, %v821
        %v914 = vpack.c.b16 %v830, %v826
        %v915 = vpack.c.b16 %v831, %v827
        %v916 = vpack.c.b16 %v832, %v828
        %v917 = vpack.c.b16 %v833, %v829
        %v918 = vpack.c.b16 %v838, %v834
        %v919 = vpack.c.b16 %v839, %v835
        %v920 = vpack.c.b16 %v840, %v836
        %v921 = vpack.c.b16 %v841, %v837
        %v922 = vpack.c.b16 %v846, %v842
        %v923 = vpack.c.b16 %v847, %v843
        %v924 = vpack.c.b16 %v848, %v844
        %v925 = vpack.c.b16 %v849, %v845
        %v926 = vpack.c.b16 %v854, %v850
        %v927 = vpack.c.b16 %v855, %v851
        %v928 = vpack.c.b16 %v856, %v852
        %v929 = vpack.c.b16 %v857, %v853
        %v930 = vpack.c.b16 %v862, %v858
        %v931 = vpack.c.b16 %v863, %v859
        %v932 = vpack.c.b16 %v864, %v860
        %v933 = vpack.c.b16 %v865, %v861
        %v934 = vpack.c.b16 %v870, %v866
        %v935 = vpack.c.b16 %v871, %v867
        %v936 = vpack.c.b16 %v872, %v868
        %v937 = vpack.c.b16 %v873, %v869
        %1002 = vmatprep.subr.bf16.mxu0 %v875
        %1003 = vmatpush1.bf16.msra.mxu0 %v874
        %1004 = vmatprep.subr.bf16.mxu0 %v879
        %1005 = vmatpush1.bf16.msra.mxu0 %v878
        %1006 = vmatprep.subr.bf16.mxu0 %v883
        %1007 = vmatpush1.bf16.msra.mxu0 %v882
        %1008 = vmatprep.subr.bf16.mxu0 %v887
        %1009 = vmatpush1.bf16.msra.mxu0 %v886
        %1010 = vmatprep.subr.bf16.mxu0 %v891
        %1011 = vmatpush1.bf16.msra.mxu0 %v890
        %1012 = vmatprep.subr.bf16.mxu0 %v895
        %1013 = vmatpush1.bf16.msra.mxu0 %v894
        %1014 = vmatprep.subr.bf16.mxu0 %v899
        %1015 = vmatpush1.bf16.msra.mxu0 %v898
        %1016 = vmatprep.subr.bf16.mxu0 %v903
        %1017 = vmatpush1.bf16.msra.mxu0 %v902
        %1018 = vmatprep.subr.bf16.mxu0 %v907
        %1019 = vmatpush1.bf16.msra.mxu0 %v906
        %1020 = vmatprep.subr.bf16.mxu0 %v911
        %1021 = vmatpush1.bf16.msra.mxu0 %v910
        %1022 = vmatprep.subr.bf16.mxu0 %v915
        %1023 = vmatpush1.bf16.msra.mxu0 %v914
        %1024 = vmatprep.subr.bf16.mxu0 %v919
        %1025 = vmatpush1.bf16.msra.mxu0 %v918
        %1026 = vmatprep.subr.bf16.mxu0 %v923
        %1027 = vmatpush1.bf16.msra.mxu0 %v922
        %1028 = vmatprep.subr.bf16.mxu0 %v927
        %1029 = vmatpush1.bf16.msra.mxu0 %v926
        %1030 = vmatprep.subr.bf16.mxu0 %v931
        %1031 = vmatpush1.bf16.msra.mxu0 %v930
        %1032 = vmatprep.subr.bf16.mxu0 %v935
        %1033 = vmatpush1.bf16.msra.mxu0 %v934
        %1034 = vmatprep.mubr.bf16.mxu0 %v595
        %1035 = vmatmul.mubr.bf16.gmra.mrb[0].mxu0 %v594
        %v1036 = vpop.f32.mrb[0].mxu0
        %v1037 = vadd.f32 %v665, %v1036
        %v1038 = vpop.f32.mrb[0].mxu0
        %v1039 = vadd.f32 %v669, %v1038
        %v1040 = vpop.f32.mrb[0].mxu0
        %v1041 = vpop.f32.mrb[0].mxu0
        %1042 = vdwg.mxu0
        %1043 = vmatprep.subr.bf16.mxu0 %v877
        %1044 = vmatpush1.bf16.msra.mxu0 %v876
        %1045 = vmatprep.subr.bf16.mxu0 %v881
        %1046 = vmatpush1.bf16.msra.mxu0 %v880
        %1047 = vmatprep.subr.bf16.mxu0 %v885
        %1048 = vmatpush1.bf16.msra.mxu0 %v884
        %1049 = vmatprep.subr.bf16.mxu0 %v889
        %1050 = vmatpush1.bf16.msra.mxu0 %v888
        %1051 = vmatprep.subr.bf16.mxu0 %v893
        %1052 = vmatpush1.bf16.msra.mxu0 %v892
        %1053 = vmatprep.subr.bf16.mxu0 %v897
        %1054 = vmatpush1.bf16.msra.mxu0 %v896
        %1055 = vmatprep.subr.bf16.mxu0 %v901
        %1056 = vmatpush1.bf16.msra.mxu0 %v900
        %1057 = vmatprep.subr.bf16.mxu0 %v905
        %1058 = vmatpush1.bf16.msra.mxu0 %v904
        %1059 = vmatprep.subr.bf16.mxu0 %v909
        %1060 = vmatpush1.bf16.msra.mxu0 %v908
        %1061 = vmatprep.subr.bf16.mxu0 %v913
        %1062 = vmatpush1.bf16.msra.mxu0 %v912
        %1063 = vmatprep.subr.bf16.mxu0 %v917
        %1064 = vmatpush1.bf16.msra.mxu0 %v916
        %1065 = vmatprep.subr.bf16.mxu0 %v921
        %1066 = vmatpush1.bf16.msra.mxu0 %v920
        %1067 = vmatprep.subr.bf16.mxu0 %v925
        %1068 = vmatpush1.bf16.msra.mxu0 %v924
        %1069 = vmatprep.subr.bf16.mxu0 %v929
        %1070 = vmatpush1.bf16.msra.mxu0 %v928
        %1071 = vmatprep.subr.bf16.mxu0 %v933
        %1072 = vmatpush1.bf16.msra.mxu0 %v932
        %1073 = vmatprep.subr.bf16.mxu0 %v937
        %1074 = vmatpush1.bf16.msra.mxu0 %v936
        %1075 = vmatprep.mubr.bf16.mxu0 %v595
        %1076 = vmatmul.mubr.bf16.gmra.mrb[0].mxu0 %v594
        %v1077 = vpop.f32.mrb[0].mxu0
        %v1078 = vadd.f32 %v673, %v1077
        %v1079 = vpop.f32.mrb[0].mxu0
        %v1080 = vadd.f32 %v677, %v1079
        %v1081 = vpop.f32.mrb[0].mxu0
        %v1082 = vpop.f32.mrb[0].mxu0
        %1083 = vdwg.mxu0
        %v1084 = vld [vmem:[%s6] sm:$0x7]
        %1086 = vset.pattern.permute.xlu0 0
        %1087 = vperm.xlu0 %1086, %v1084
        %v1088 = vpop.permute.xlu0 %1087
        %v1090 = vmul.f32 %v1037, %v1088
        %v1091 = vmul.f32 %v1039, %v1088
        %v1092 = vmul.f32 %v1078, %v1088
        %v1093 = vmul.f32 %v1080, %v1088
        %v1094 = vld [vmem:[%s7] sm:$0x7]
        %1096 = vset.pattern.permute.xlu0 0
        %1097 = vperm.xlu0 %1096, %v1094
        %v1098 = vpop.permute.xlu0 %1097
        %v1100 = vadd.f32 %v1090, %v1098
        %v1101 = vadd.f32 %v1091, %v1098
        %v1102 = vadd.f32 %v1092, %v1098
        %v1103 = vadd.f32 %v1093, %v1098
        %vm1104 = vcmp.ge.f32.partialorder %v1100, 0.0
        %vm1105 = vcmp.ge.f32.partialorder %v1101, 0.0
        %vm1106 = vcmp.ge.f32.partialorder %v1102, 0.0
        %vm1107 = vcmp.ge.f32.partialorder %v1103, 0.0
        %v1108 = vmul.f32 %v1100, 0.01
        %v1109 = vmul.f32 %v1101, 0.01
        %v1110 = vmul.f32 %v1102, 0.01
        %v1111 = vmul.f32 %v1103, 0.01
        %v1112 = vsel %vm1104, %v1100, %v1108
        %v1113 = vsel %vm1105, %v1101, %v1109
        %v1114 = vsel %vm1106, %v1102, %v1110
        %v1115 = vsel %vm1107, %v1103, %v1111
        %v1116 = vpack.c.bf16 %v1112, %v1112
        %v1117 = vpack.c.bf16 %v1113, %v1113
        %v1118 = vpack.c.bf16 %v1114, %v1114
        %v1119 = vpack.c.bf16 %v1115, %v1115
        %v1120 = vld [vmem:[%s8] sm:$0xff]
        %v1121 = vld [vmem:[%s8 + $0x8] sm:$0xff]
        %v1122 = vld [vmem:[%s8 + $0x10] sm:$0xff]
        %v1123 = vld [vmem:[%s8 + $0x18] sm:$0xff]
        %v1124 = vld [vmem:[%s8 + $0x20] sm:$0xff]
        %v1125 = vld [vmem:[%s8 + $0x28] sm:$0xff]
        %v1126 = vld [vmem:[%s8 + $0x30] sm:$0xff]
        %v1127 = vld [vmem:[%s8 + $0x38] sm:$0xff]
        %v1128 = vld [vmem:[%s8 + $0x40] sm:$0xff]
        %v1129 = vld [vmem:[%s8 + $0x48] sm:$0xff]
        %v1130 = vld [vmem:[%s8 + $0x50] sm:$0xff]
        %v1131 = vld [vmem:[%s8 + $0x58] sm:$0xff]
        %v1132 = vld [vmem:[%s8 + $0x60] sm:$0xff]
        %v1133 = vld [vmem:[%s8 + $0x68] sm:$0xff]
        %v1134 = vld [vmem:[%s8 + $0x70] sm:$0xff]
        %v1135 = vld [vmem:[%s8 + $0x78] sm:$0xff]
        %v1136 = vld [vmem:[%s8 + $0x80] sm:$0xff]
        %v1137 = vld [vmem:[%s8 + $0x88] sm:$0xff]
        %v1138 = vld [vmem:[%s8 + $0x90] sm:$0xff]
        %v1139 = vld [vmem:[%s8 + $0x98] sm:$0xff]
        %v1140 = vld [vmem:[%s8 + $0xa0] sm:$0xff]
        %v1141 = vld [vmem:[%s8 + $0xa8] sm:$0xff]
        %v1142 = vld [vmem:[%s8 + $0xb0] sm:$0xff]
        %v1143 = vld [vmem:[%s8 + $0xb8] sm:$0xff]
        %v1144 = vld [vmem:[%s8 + $0xc0] sm:$0xff]
        %v1145 = vld [vmem:[%s8 + $0xc8] sm:$0xff]
        %v1146 = vld [vmem:[%s8 + $0xd0] sm:$0xff]
        %v1147 = vld [vmem:[%s8 + $0xd8] sm:$0xff]
        %v1148 = vld [vmem:[%s8 + $0xe0] sm:$0xff]
        %v1149 = vld [vmem:[%s8 + $0xe8] sm:$0xff]
        %v1150 = vld [vmem:[%s8 + $0xf0] sm:$0xff]
        %v1151 = vld [vmem:[%s8 + $0xf8] sm:$0xff]
        %v1152 = vld [vmem:[%s8 + $0x100] sm:$0xff]
        %v1153 = vld [vmem:[%s8 + $0x108] sm:$0xff]
        %v1154 = vld [vmem:[%s8 + $0x110] sm:$0xff]
        %v1155 = vld [vmem:[%s8 + $0x118] sm:$0xff]
        %v1156 = vld [vmem:[%s8 + $0x120] sm:$0xff]
        %v1157 = vld [vmem:[%s8 + $0x128] sm:$0xff]
        %v1158 = vld [vmem:[%s8 + $0x130] sm:$0xff]
        %v1159 = vld [vmem:[%s8 + $0x138] sm:$0xff]
        %v1160 = vld [vmem:[%s8 + $0x140] sm:$0xff]
        %v1161 = vld [vmem:[%s8 + $0x148] sm:$0xff]
        %v1162 = vld [vmem:[%s8 + $0x150] sm:$0xff]
        %v1163 = vld [vmem:[%s8 + $0x158] sm:$0xff]
        %v1164 = vld [vmem:[%s8 + $0x160] sm:$0xff]
        %v1165 = vld [vmem:[%s8 + $0x168] sm:$0xff]
        %v1166 = vld [vmem:[%s8 + $0x170] sm:$0xff]
        %v1167 = vld [vmem:[%s8 + $0x178] sm:$0xff]
        %v1168 = vld [vmem:[%s8 + $0x180] sm:$0xff]
        %v1169 = vld [vmem:[%s8 + $0x188] sm:$0xff]
        %v1170 = vld [vmem:[%s8 + $0x190] sm:$0xff]
        %v1171 = vld [vmem:[%s8 + $0x198] sm:$0xff]
        %v1172 = vld [vmem:[%s8 + $0x1a0] sm:$0xff]
        %v1173 = vld [vmem:[%s8 + $0x1a8] sm:$0xff]
        %v1174 = vld [vmem:[%s8 + $0x1b0] sm:$0xff]
        %v1175 = vld [vmem:[%s8 + $0x1b8] sm:$0xff]
        %v1176 = vld [vmem:[%s8 + $0x1c0] sm:$0xff]
        %v1177 = vld [vmem:[%s8 + $0x1c8] sm:$0xff]
        %v1178 = vld [vmem:[%s8 + $0x1d0] sm:$0xff]
        %v1179 = vld [vmem:[%s8 + $0x1d8] sm:$0xff]
        %v1180 = vld [vmem:[%s8 + $0x1e0] sm:$0xff]
        %v1181 = vld [vmem:[%s8 + $0x1e8] sm:$0xff]
        %v1182 = vld [vmem:[%s8 + $0x1f0] sm:$0xff]
        %v1183 = vld [vmem:[%s8 + $0x1f8] sm:$0xff]
        %v1184 = vld [vmem:[%s9] sm:$0x3]
        %v1186 = vlaneseq
        %v1187 = vshrl.u32 %v1186, 7
        %v1188 = vsub.s32 0, %v1187
        %v1189 = vrot.slane %v1184, %v1188
        %v1190 = vlaneseq
        %v1191 = vshrl.u32 %v1190, 7
        %v1192 = vsub.s32 1, %v1191
        %v1193 = vrot.slane %v1184, %v1192
        %v1260 = vunpack.c.l.b16 %v1120
        %v1261 = vunpack.c.h.b16 %v1120
        %v1262 = vunpack.c.l.b16 %v1121
        %v1263 = vunpack.c.h.b16 %v1121
        %v1264 = vunpack.c.l.b16 %v1122
        %v1265 = vunpack.c.h.b16 %v1122
        %v1266 = vunpack.c.l.b16 %v1123
        %v1267 = vunpack.c.h.b16 %v1123
        %v1268 = vunpack.c.l.b16 %v1124
        %v1269 = vunpack.c.h.b16 %v1124
        %v1270 = vunpack.c.l.b16 %v1125
        %v1271 = vunpack.c.h.b16 %v1125
        %v1272 = vunpack.c.l.b16 %v1126
        %v1273 = vunpack.c.h.b16 %v1126
        %v1274 = vunpack.c.l.b16 %v1127
        %v1275 = vunpack.c.h.b16 %v1127
        %v1276 = vunpack.c.l.b16 %v1128
        %v1277 = vunpack.c.h.b16 %v1128
        %v1278 = vunpack.c.l.b16 %v1129
        %v1279 = vunpack.c.h.b16 %v1129
        %v1280 = vunpack.c.l.b16 %v1130
        %v1281 = vunpack.c.h.b16 %v1130
        %v1282 = vunpack.c.l.b16 %v1131
        %v1283 = vunpack.c.h.b16 %v1131
        %v1284 = vunpack.c.l.b16 %v1132
        %v1285 = vunpack.c.h.b16 %v1132
        %v1286 = vunpack.c.l.b16 %v1133
        %v1287 = vunpack.c.h.b16 %v1133
        %v1288 = vunpack.c.l.b16 %v1134
        %v1289 = vunpack.c.h.b16 %v1134
        %v1290 = vunpack.c.l.b16 %v1135
        %v1291 = vunpack.c.h.b16 %v1135
        %v1292 = vunpack.c.l.b16 %v1136
        %v1293 = vunpack.c.h.b16 %v1136
        %v1294 = vunpack.c.l.b16 %v1137
        %v1295 = vunpack.c.h.b16 %v1137
        %v1296 = vunpack.c.l.b16 %v1138
        %v1297 = vunpack.c.h.b16 %v1138
        %v1298 = vunpack.c.l.b16 %v1139
        %v1299 = vunpack.c.h.b16 %v1139
        %v1300 = vunpack.c.l.b16 %v1140
        %v1301 = vunpack.c.h.b16 %v1140
        %v1302 = vunpack.c.l.b16 %v1141
        %v1303 = vunpack.c.h.b16 %v1141
        %v1304 = vunpack.c.l.b16 %v1142
        %v1305 = vunpack.c.h.b16 %v1142
        %v1306 = vunpack.c.l.b16 %v1143
        %v1307 = vunpack.c.h.b16 %v1143
        %v1308 = vunpack.c.l.b16 %v1144
        %v1309 = vunpack.c.h.b16 %v1144
        %v1310 = vunpack.c.l.b16 %v1145
        %v1311 = vunpack.c.h.b16 %v1145
        %v1312 = vunpack.c.l.b16 %v1146
        %v1313 = vunpack.c.h.b16 %v1146
        %v1314 = vunpack.c.l.b16 %v1147
        %v1315 = vunpack.c.h.b16 %v1147
        %v1316 = vunpack.c.l.b16 %v1148
        %v1317 = vunpack.c.h.b16 %v1148
        %v1318 = vunpack.c.l.b16 %v1149
        %v1319 = vunpack.c.h.b16 %v1149
        %v1320 = vunpack.c.l.b16 %v1150
        %v1321 = vunpack.c.h.b16 %v1150
        %v1322 = vunpack.c.l.b16 %v1151
        %v1323 = vunpack.c.h.b16 %v1151
        %v1324 = vunpack.c.l.b16 %v1152
        %v1325 = vunpack.c.h.b16 %v1152
        %v1326 = vunpack.c.l.b16 %v1153
        %v1327 = vunpack.c.h.b16 %v1153
        %v1328 = vunpack.c.l.b16 %v1154
        %v1329 = vunpack.c.h.b16 %v1154
        %v1330 = vunpack.c.l.b16 %v1155
        %v1331 = vunpack.c.h.b16 %v1155
        %v1332 = vunpack.c.l.b16 %v1156
        %v1333 = vunpack.c.h.b16 %v1156
        %v1334 = vunpack.c.l.b16 %v1157
        %v1335 = vunpack.c.h.b16 %v1157
        %v1336 = vunpack.c.l.b16 %v1158
        %v1337 = vunpack.c.h.b16 %v1158
        %v1338 = vunpack.c.l.b16 %v1159
        %v1339 = vunpack.c.h.b16 %v1159
        %v1340 = vunpack.c.l.b16 %v1160
        %v1341 = vunpack.c.h.b16 %v1160
        %v1342 = vunpack.c.l.b16 %v1161
        %v1343 = vunpack.c.h.b16 %v1161
        %v1344 = vunpack.c.l.b16 %v1162
        %v1345 = vunpack.c.h.b16 %v1162
        %v1346 = vunpack.c.l.b16 %v1163
        %v1347 = vunpack.c.h.b16 %v1163
        %v1348 = vunpack.c.l.b16 %v1164
        %v1349 = vunpack.c.h.b16 %v1164
        %v1350 = vunpack.c.l.b16 %v1165
        %v1351 = vunpack.c.h.b16 %v1165
        %v1352 = vunpack.c.l.b16 %v1166
        %v1353 = vunpack.c.h.b16 %v1166
        %v1354 = vunpack.c.l.b16 %v1167
        %v1355 = vunpack.c.h.b16 %v1167
        %v1356 = vunpack.c.l.b16 %v1168
        %v1357 = vunpack.c.h.b16 %v1168
        %v1358 = vunpack.c.l.b16 %v1169
        %v1359 = vunpack.c.h.b16 %v1169
        %v1360 = vunpack.c.l.b16 %v1170
        %v1361 = vunpack.c.h.b16 %v1170
        %v1362 = vunpack.c.l.b16 %v1171
        %v1363 = vunpack.c.h.b16 %v1171
        %v1364 = vunpack.c.l.b16 %v1172
        %v1365 = vunpack.c.h.b16 %v1172
        %v1366 = vunpack.c.l.b16 %v1173
        %v1367 = vunpack.c.h.b16 %v1173
        %v1368 = vunpack.c.l.b16 %v1174
        %v1369 = vunpack.c.h.b16 %v1174
        %v1370 = vunpack.c.l.b16 %v1175
        %v1371 = vunpack.c.h.b16 %v1175
        %v1372 = vunpack.c.l.b16 %v1176
        %v1373 = vunpack.c.h.b16 %v1176
        %v1374 = vunpack.c.l.b16 %v1177
        %v1375 = vunpack.c.h.b16 %v1177
        %v1376 = vunpack.c.l.b16 %v1178
        %v1377 = vunpack.c.h.b16 %v1178
        %v1378 = vunpack.c.l.b16 %v1179
        %v1379 = vunpack.c.h.b16 %v1179
        %v1380 = vunpack.c.l.b16 %v1180
        %v1381 = vunpack.c.h.b16 %v1180
        %v1382 = vunpack.c.l.b16 %v1181
        %v1383 = vunpack.c.h.b16 %v1181
        %v1384 = vunpack.c.l.b16 %v1182
        %v1385 = vunpack.c.h.b16 %v1182
        %v1386 = vunpack.c.l.b16 %v1183
        %v1387 = vunpack.c.h.b16 %v1183
        %v1388 = vpack.c.b16 %v1262, %v1260
        %v1389 = vpack.c.b16 %v1263, %v1261
        %v1390 = vpack.c.b16 %v1266, %v1264
        %v1391 = vpack.c.b16 %v1267, %v1265
        %v1392 = vpack.c.b16 %v1270, %v1268
        %v1393 = vpack.c.b16 %v1271, %v1269
        %v1394 = vpack.c.b16 %v1274, %v1272
        %v1395 = vpack.c.b16 %v1275, %v1273
        %v1396 = vpack.c.b16 %v1278, %v1276
        %v1397 = vpack.c.b16 %v1279, %v1277
        %v1398 = vpack.c.b16 %v1282, %v1280
        %v1399 = vpack.c.b16 %v1283, %v1281
        %v1400 = vpack.c.b16 %v1286, %v1284
        %v1401 = vpack.c.b16 %v1287, %v1285
        %v1402 = vpack.c.b16 %v1290, %v1288
        %v1403 = vpack.c.b16 %v1291, %v1289
        %v1404 = vpack.c.b16 %v1294, %v1292
        %v1405 = vpack.c.b16 %v1295, %v1293
        %v1406 = vpack.c.b16 %v1298, %v1296
        %v1407 = vpack.c.b16 %v1299, %v1297
        %v1408 = vpack.c.b16 %v1302, %v1300
        %v1409 = vpack.c.b16 %v1303, %v1301
        %v1410 = vpack.c.b16 %v1306, %v1304
        %v1411 = vpack.c.b16 %v1307, %v1305
        %v1412 = vpack.c.b16 %v1310, %v1308
        %v1413 = vpack.c.b16 %v1311, %v1309
        %v1414 = vpack.c.b16 %v1314, %v1312
        %v1415 = vpack.c.b16 %v1315, %v1313
        %v1416 = vpack.c.b16 %v1318, %v1316
        %v1417 = vpack.c.b16 %v1319, %v1317
        %v1418 = vpack.c.b16 %v1322, %v1320
        %v1419 = vpack.c.b16 %v1323, %v1321
        %v1420 = vpack.c.b16 %v1326, %v1324
        %v1421 = vpack.c.b16 %v1327, %v1325
        %v1422 = vpack.c.b16 %v1330, %v1328
        %v1423 = vpack.c.b16 %v1331, %v1329
        %v1424 = vpack.c.b16 %v1334, %v1332
        %v1425 = vpack.c.b16 %v1335, %v1333
        %v1426 = vpack.c.b16 %v1338, %v1336
        %v1427 = vpack.c.b16 %v1339, %v1337
        %v1428 = vpack.c.b16 %v1342, %v1340
        %v1429 = vpack.c.b16 %v1343, %v1341
        %v1430 = vpack.c.b16 %v1346, %v1344
        %v1431 = vpack.c.b16 %v1347, %v1345
        %v1432 = vpack.c.b16 %v1350, %v1348
        %v1433 = vpack.c.b16 %v1351, %v1349
        %v1434 = vpack.c.b16 %v1354, %v1352
        %v1435 = vpack.c.b16 %v1355, %v1353
        %v1436 = vpack.c.b16 %v1358, %v1356
        %v1437 = vpack.c.b16 %v1359, %v1357
        %v1438 = vpack.c.b16 %v1362, %v1360
        %v1439 = vpack.c.b16 %v1363, %v1361
        %v1440 = vpack.c.b16 %v1366, %v1364
        %v1441 = vpack.c.b16 %v1367, %v1365
        %v1442 = vpack.c.b16 %v1370, %v1368
        %v1443 = vpack.c.b16 %v1371, %v1369
        %v1444 = vpack.c.b16 %v1374, %v1372
        %v1445 = vpack.c.b16 %v1375, %v1373
        %v1446 = vpack.c.b16 %v1378, %v1376
        %v1447 = vpack.c.b16 %v1379, %v1377
        %v1448 = vpack.c.b16 %v1382, %v1380
        %v1449 = vpack.c.b16 %v1383, %v1381
        %v1450 = vpack.c.b16 %v1386, %v1384
        %v1451 = vpack.c.b16 %v1387, %v1385
        %1516 = vmatprep.subr.bf16.mxu0 %v1389
        %1517 = vmatpush1.bf16.msra.mxu0 %v1388
        %1518 = vmatprep.subr.bf16.mxu0 %v1391
        %1519 = vmatpush1.bf16.msra.mxu0 %v1390
        %1520 = vmatprep.subr.bf16.mxu0 %v1393
        %1521 = vmatpush1.bf16.msra.mxu0 %v1392
        %1522 = vmatprep.subr.bf16.mxu0 %v1395
        %1523 = vmatpush1.bf16.msra.mxu0 %v1394
        %1524 = vmatprep.subr.bf16.mxu0 %v1397
        %1525 = vmatpush1.bf16.msra.mxu0 %v1396
        %1526 = vmatprep.subr.bf16.mxu0 %v1399
        %1527 = vmatpush1.bf16.msra.mxu0 %v1398
        %1528 = vmatprep.subr.bf16.mxu0 %v1401
        %1529 = vmatpush1.bf16.msra.mxu0 %v1400
        %1530 = vmatprep.subr.bf16.mxu0 %v1403
        %1531 = vmatpush1.bf16.msra.mxu0 %v1402
        %1532 = vmatprep.subr.bf16.mxu0 %v1405
        %1533 = vmatpush1.bf16.msra.mxu0 %v1404
        %1534 = vmatprep.subr.bf16.mxu0 %v1407
        %1535 = vmatpush1.bf16.msra.mxu0 %v1406
        %1536 = vmatprep.subr.bf16.mxu0 %v1409
        %1537 = vmatpush1.bf16.msra.mxu0 %v1408
        %1538 = vmatprep.subr.bf16.mxu0 %v1411
        %1539 = vmatpush1.bf16.msra.mxu0 %v1410
        %1540 = vmatprep.subr.bf16.mxu0 %v1413
        %1541 = vmatpush1.bf16.msra.mxu0 %v1412
        %1542 = vmatprep.subr.bf16.mxu0 %v1415
        %1543 = vmatpush1.bf16.msra.mxu0 %v1414
        %1544 = vmatprep.subr.bf16.mxu0 %v1417
        %1545 = vmatpush1.bf16.msra.mxu0 %v1416
        %1546 = vmatprep.subr.bf16.mxu0 %v1419
        %1547 = vmatpush1.bf16.msra.mxu0 %v1418
        %1548 = vmatprep.mubr.bf16.mxu0 %v1117
        %1549 = vmatmul.mubr.bf16.gmra.mrb[0].mxu0 %v1116
        %v1550 = vpop.f32.mrb[0].mxu0
        %v1551 = vadd.f32 %v1189, %v1550
        %v1552 = vpop.f32.mrb[0].mxu0
        %v1553 = vadd.f32 %v1193, %v1552
        %v1554 = vpop.f32.mrb[0].mxu0
        %v1555 = vpop.f32.mrb[0].mxu0
        %1556 = vdwg.mxu0
        %1557 = vmatprep.subr.bf16.mxu0 %v1421
        %1558 = vmatpush1.bf16.msra.mxu0 %v1420
        %1559 = vmatprep.subr.bf16.mxu0 %v1423
        %1560 = vmatpush1.bf16.msra.mxu0 %v1422
        %1561 = vmatprep.subr.bf16.mxu0 %v1425
        %1562 = vmatpush1.bf16.msra.mxu0 %v1424
        %1563 = vmatprep.subr.bf16.mxu0 %v1427
        %1564 = vmatpush1.bf16.msra.mxu0 %v1426
        %1565 = vmatprep.subr.bf16.mxu0 %v1429
        %1566 = vmatpush1.bf16.msra.mxu0 %v1428
        %1567 = vmatprep.subr.bf16.mxu0 %v1431
        %1568 = vmatpush1.bf16.msra.mxu0 %v1430
        %1569 = vmatprep.subr.bf16.mxu0 %v1433
        %1570 = vmatpush1.bf16.msra.mxu0 %v1432
        %1571 = vmatprep.subr.bf16.mxu0 %v1435
        %1572 = vmatpush1.bf16.msra.mxu0 %v1434
        %1573 = vmatprep.subr.bf16.mxu0 %v1437
        %1574 = vmatpush1.bf16.msra.mxu0 %v1436
        %1575 = vmatprep.subr.bf16.mxu0 %v1439
        %1576 = vmatpush1.bf16.msra.mxu0 %v1438
        %1577 = vmatprep.subr.bf16.mxu0 %v1441
        %1578 = vmatpush1.bf16.msra.mxu0 %v1440
        %1579 = vmatprep.subr.bf16.mxu0 %v1443
        %1580 = vmatpush1.bf16.msra.mxu0 %v1442
        %1581 = vmatprep.subr.bf16.mxu0 %v1445
        %1582 = vmatpush1.bf16.msra.mxu0 %v1444
        %1583 = vmatprep.subr.bf16.mxu0 %v1447
        %1584 = vmatpush1.bf16.msra.mxu0 %v1446
        %1585 = vmatprep.subr.bf16.mxu0 %v1449
        %1586 = vmatpush1.bf16.msra.mxu0 %v1448
        %1587 = vmatprep.subr.bf16.mxu0 %v1451
        %1588 = vmatpush1.bf16.msra.mxu0 %v1450
        %1589 = vmatprep.mubr.bf16.mxu0 %v1119
        %1590 = vmatmul.mubr.bf16.gmra.mrb[0].mxu0 %v1118
        %v1591 = vpop.f32.mrb[0].mxu0
        %v1592 = vadd.f32 %v1551, %v1591
        %v1593 = vpop.f32.mrb[0].mxu0
        %v1594 = vadd.f32 %v1553, %v1593
        %v1595 = vpop.f32.mrb[0].mxu0
        %v1596 = vpop.f32.mrb[0].mxu0
        %1597 = vdwg.mxu0
        %v1598 = vld [vmem:[%s10] sm:$0x7]
        %1600 = vset.pattern.permute.xlu0 0
        %1601 = vperm.xlu0 %1600, %v1598
        %v1602 = vpop.permute.xlu0 %1601
        %v1604 = vmul.f32 %v1592, %v1602
        %v1605 = vmul.f32 %v1594, %v1602
        %v1606 = vld [vmem:[%s11] sm:$0x7]
        %1608 = vset.pattern.permute.xlu0 0
        %1609 = vperm.xlu0 %1608, %v1606
        %v1610 = vpop.permute.xlu0 %1609
        %v1612 = vadd.f32 %v1604, %v1610
        %v1613 = vadd.f32 %v1605, %v1610
        %vm1614 = vcmp.ge.f32.partialorder %v1612, 0.0
        %vm1615 = vcmp.ge.f32.partialorder %v1613, 0.0
        %v1616 = vmul.f32 %v1612, 0.01
        %v1617 = vmul.f32 %v1613, 0.01
        %v1618 = vsel %vm1614, %v1612, %v1616
        %v1619 = vsel %vm1615, %v1613, %v1617
        %v1620 = vld [vmem:[%s13] sm:$0x7]
        %1622 = vset.pattern.permute.xlu0 0
        %1623 = vperm.xlu0 %1622, %v1620
        %v1624 = vpop.permute.xlu0 %1623
        %v1626 = vmul.f32 %v1618, %v1624
        %v1627 = vmul.f32 %v1619, %v1624
        %vm1628 = vcmask 1042432
        %v1629 = vsel %vm1628, %v1626, 0.0
        %v1630 = vrot.slane %v1629, 4
        %v1631 = vadd.f32 %v1629, %v1630
        %v1632 = vrot.slane %v1631, 2
        %v1633 = vadd.f32 %v1631, %v1632
        %v1634 = vrot.slane %v1633, 1
        %v1635 = vadd.f32 %v1633, %v1634
        %v1636 = vsel %vm1628, %v1627, 0.0
        %v1637 = vrot.slane %v1636, 4
        %v1638 = vadd.f32 %v1636, %v1637
        %v1639 = vrot.slane %v1638, 2
        %v1640 = vadd.f32 %v1638, %v1639
        %v1641 = vrot.slane %v1640, 1
        %v1642 = vadd.f32 %v1640, %v1641
        %v1643 = vpack.c.bf16 %v1635, %v1635
        %v1644 = vpack.c.bf16 %v1642, %v1642
        %v1645 = vld [vmem:[%s12] sm:$0xf]
        %v1646 = vld [vmem:[%s12 + $0x4] sm:$0xf]
        %v1647 = vld [vmem:[%s12 + $0x8] sm:$0xf]
        %v1648 = vld [vmem:[%s12 + $0xc] sm:$0xf]
        %v1649 = vld [vmem:[%s12 + $0x10] sm:$0xf]
        %v1650 = vld [vmem:[%s12 + $0x14] sm:$0xf]
        %v1651 = vld [vmem:[%s12 + $0x18] sm:$0xf]
        %v1652 = vld [vmem:[%s12 + $0x1c] sm:$0xf]
        %v1653 = vld [vmem:[%s12 + $0x20] sm:$0xf]
        %v1654 = vld [vmem:[%s12 + $0x24] sm:$0xf]
        %v1655 = vld [vmem:[%s12 + $0x28] sm:$0xf]
        %v1656 = vld [vmem:[%s12 + $0x2c] sm:$0xf]
        %v1657 = vld [vmem:[%s12 + $0x30] sm:$0xf]
        %v1658 = vld [vmem:[%s12 + $0x34] sm:$0xf]
        %v1659 = vld [vmem:[%s12 + $0x38] sm:$0xf]
        %v1660 = vld [vmem:[%s12 + $0x3c] sm:$0xf]
        %v1661 = vld [vmem:[%s12 + $0x40] sm:$0xf]
        %v1662 = vld [vmem:[%s12 + $0x44] sm:$0xf]
        %v1663 = vld [vmem:[%s12 + $0x48] sm:$0xf]
        %v1664 = vld [vmem:[%s12 + $0x4c] sm:$0xf]
        %v1665 = vld [vmem:[%s12 + $0x50] sm:$0xf]
        %v1666 = vld [vmem:[%s12 + $0x54] sm:$0xf]
        %v1667 = vld [vmem:[%s12 + $0x58] sm:$0xf]
        %v1668 = vld [vmem:[%s12 + $0x5c] sm:$0xf]
        %v1669 = vld [vmem:[%s12 + $0x60] sm:$0xf]
        %v1670 = vld [vmem:[%s12 + $0x64] sm:$0xf]
        %v1671 = vld [vmem:[%s12 + $0x68] sm:$0xf]
        %v1672 = vld [vmem:[%s12 + $0x6c] sm:$0xf]
        %v1673 = vld [vmem:[%s12 + $0x70] sm:$0xf]
        %v1674 = vld [vmem:[%s12 + $0x74] sm:$0xf]
        %v1675 = vld [vmem:[%s12 + $0x78] sm:$0xf]
        %v1676 = vld [vmem:[%s12 + $0x7c] sm:$0xf]
        %v1677 = vld [vmem:[%s14] sm:$0x1]
        %v1710 = vunpack.c.l.b16 %v1645
        %v1711 = vunpack.c.l.b16 %v1646
        %v1712 = vunpack.c.l.b16 %v1647
        %v1713 = vunpack.c.l.b16 %v1648
        %v1714 = vunpack.c.l.b16 %v1649
        %v1715 = vunpack.c.l.b16 %v1650
        %v1716 = vunpack.c.l.b16 %v1651
        %v1717 = vunpack.c.l.b16 %v1652
        %v1718 = vunpack.c.l.b16 %v1653
        %v1719 = vunpack.c.l.b16 %v1654
        %v1720 = vunpack.c.l.b16 %v1655
        %v1721 = vunpack.c.l.b16 %v1656
        %v1722 = vunpack.c.l.b16 %v1657
        %v1723 = vunpack.c.l.b16 %v1658
        %v1724 = vunpack.c.l.b16 %v1659
        %v1725 = vunpack.c.l.b16 %v1660
        %v1726 = vunpack.c.l.b16 %v1661
        %v1727 = vunpack.c.l.b16 %v1662
        %v1728 = vunpack.c.l.b16 %v1663
        %v1729 = vunpack.c.l.b16 %v1664
        %v1730 = vunpack.c.l.b16 %v1665
        %v1731 = vunpack.c.l.b16 %v1666
        %v1732 = vunpack.c.l.b16 %v1667
        %v1733 = vunpack.c.l.b16 %v1668
        %v1734 = vunpack.c.l.b16 %v1669
        %v1735 = vunpack.c.l.b16 %v1670
        %v1736 = vunpack.c.l.b16 %v1671
        %v1737 = vunpack.c.l.b16 %v1672
        %v1738 = vunpack.c.l.b16 %v1673
        %v1739 = vunpack.c.l.b16 %v1674
        %v1740 = vunpack.c.l.b16 %v1675
        %v1741 = vunpack.c.l.b16 %v1676
        %v1742 = vpack.c.b16 %v1711, %v1710
        %v1743 = vpack.c.b16 %v1713, %v1712
        %v1744 = vpack.c.b16 %v1715, %v1714
        %v1745 = vpack.c.b16 %v1717, %v1716
        %v1746 = vpack.c.b16 %v1719, %v1718
        %v1747 = vpack.c.b16 %v1721, %v1720
        %v1748 = vpack.c.b16 %v1723, %v1722
        %v1749 = vpack.c.b16 %v1725, %v1724
        %v1750 = vpack.c.b16 %v1727, %v1726
        %v1751 = vpack.c.b16 %v1729, %v1728
        %v1752 = vpack.c.b16 %v1731, %v1730
        %v1753 = vpack.c.b16 %v1733, %v1732
        %v1754 = vpack.c.b16 %v1735, %v1734
        %v1755 = vpack.c.b16 %v1737, %v1736
        %v1756 = vpack.c.b16 %v1739, %v1738
        %v1757 = vpack.c.b16 %v1741, %v1740
        %1774 = vmatprep.subr.bf16.mxu0 0
        %1775 = vmatpush1.bf16.msra.mxu0 %v1742
        %1776 = vmatprep.subr.bf16.mxu0 0
        %1777 = vmatpush1.bf16.msra.mxu0 %v1743
        %1778 = vmatprep.subr.bf16.mxu0 0
        %1779 = vmatpush1.bf16.msra.mxu0 %v1744
        %1780 = vmatprep.subr.bf16.mxu0 0
        %1781 = vmatpush1.bf16.msra.mxu0 %v1745
        %1782 = vmatprep.subr.bf16.mxu0 0
        %1783 = vmatpush1.bf16.msra.mxu0 %v1746
        %1784 = vmatprep.subr.bf16.mxu0 0
        %1785 = vmatpush1.bf16.msra.mxu0 %v1747
        %1786 = vmatprep.subr.bf16.mxu0 0
        %1787 = vmatpush1.bf16.msra.mxu0 %v1748
        %1788 = vmatprep.subr.bf16.mxu0 0
        %1789 = vmatpush1.bf16.msra.mxu0 %v1749
        %1790 = vmatprep.subr.bf16.mxu0 0
        %1791 = vmatpush1.bf16.msra.mxu0 %v1750
        %1792 = vmatprep.subr.bf16.mxu0 0
        %1793 = vmatpush1.bf16.msra.mxu0 %v1751
        %1794 = vmatprep.subr.bf16.mxu0 0
        %1795 = vmatpush1.bf16.msra.mxu0 %v1752
        %1796 = vmatprep.subr.bf16.mxu0 0
        %1797 = vmatpush1.bf16.msra.mxu0 %v1753
        %1798 = vmatprep.subr.bf16.mxu0 0
        %1799 = vmatpush1.bf16.msra.mxu0 %v1754
        %1800 = vmatprep.subr.bf16.mxu0 0
        %1801 = vmatpush1.bf16.msra.mxu0 %v1755
        %1802 = vmatprep.subr.bf16.mxu0 0
        %1803 = vmatpush1.bf16.msra.mxu0 %v1756
        %1804 = vmatprep.subr.bf16.mxu0 0
        %1805 = vmatpush1.bf16.msra.mxu0 %v1757
        %1806 = vmatprep.mubr.bf16.mxu0 %v1644
        %1807 = vmatmul.mubr.bf16.gmra.mrb[0].mxu0 %v1643
        %v1808 = vpop.f32.mrb[0].mxu0
        %v1809 = vadd.f32 %v1677, %v1808
        %v1810 = vpop.f32.mrb[0].mxu0
        %v1811 = vpop.f32.mrb[0].mxu0
        %v1812 = vpop.f32.mrb[0].mxu0
        %1813 = vdwg.mxu0
        %v1814 = vld [vmem:[%s578] sm:$0x77]
        %v1815 = vlaneseq
        %v1816 = vshrl.u32 %v1815, 7
        %v1817 = vsub.s32 0, %v1816
        %v1818 = vrot.slane %v1809, %v1817
        %v1819 = vadd.f32 %v590, %v1818
        %v1820 = vrot.slane %v590, 4
        %v1822 = vsub.f32 %v1819, %v1820
        %v1823 = vadd.f32 %v1814, %v1818
        %v1825 = vrot.slane %v1814, 4
        %v1827 = vsub.f32 %v1823, %v1825
        %v1828 = vmul.f32 %v1822, %v1822
        %v1829 = vsel %vm1628, %v1828, 0.0
        %1830 = vadd.xlane.f32.xlu0 %v1829
        %v1831 = vpop.xlane.xlu0 %1830
        %v1832 = vmul.f32 %v1827, %v1827
        %v1833 = vsel %vm1628, %v1832, 0.0
        %1834 = vadd.xlane.f32.xlu0 %v1833
        %v1835 = vpop.xlane.xlu0 %1834
        %v1836 = vadd.f32 %v1831, 1e-12
        %v1837 = vrsqrt.pop %v1836
        %v1838 = vadd.f32 %v1835, 1e-12
        %v1839 = vrsqrt.pop %v1838
        %v1840 = vmul.f32 %v1831, %v1837
        %v1841 = vsub.f32 0.0, %v1840
        %v1842 = vmul.f32 %v1835, %v1839
        %v1843 = vsub.f32 0.0, %v1842
        %v1844 = vsub.f32 %v1841, %v1843
        %v1845 = vsub.f32 1.0, %v1844
        %vm1846 = vcmp.gt.f32.partialorder %v1845, 0.0
        %v1847 = vmul.f32 %v1822, %v1837
        %v1848 = vmul.f32 %v1827, %v1839
        %v1849 = vsub.f32 %v1847, %v1848
        %v1850 = vsel %vm1846, 1, 0
        %vm1851 = vcmp.eq.s32.totalorder %v1850, 1
        %v1852 = vsel %vm1851, %v1849, 0.0
        %v1853 = vsel %vm1628, %v1852, 0.0
        %v1854 = vrot.slane %v1853, 4
        %v1855 = vadd.f32 %v1853, %v1854
        %v1856 = vrot.slane %v1855, 2
        %v1857 = vadd.f32 %v1855, %v1856
        %v1858 = vrot.slane %v1857, 1
        %v1859 = vadd.f32 %v1857, %v1858
        %v1860 = vmul.f32 %v1859, 0.16666667
        %v1861 = vmul.f32 %v1860, 5.0
        %v1862 = vsub.f32 %v1809, %v1861
        %v1863 = vld [vmem:[%s583] sm:$0xff]
        %v1864 = vlaneseq
        %v1865 = vshrl.u32 %v1864, 7
        %v1866 = vsub.s32 0, %v1865
        %v1867 = vrot.slane %v1862, %v1866
        %v1868 = vadd.f32 %v1863, %v1867
        %v1870 = vrot.slane %v1863, 4
        %v1872 = vsub.f32 %v1868, %v1870
        %v1873 = vmul.f32 %v1872, %v1872
        %vm1874 = vcmask 1043456
        %v1875 = vsel %vm1874, %v1873, 0.0
        %1876 = vadd.xlane.f32.xlu0 %v1875
        %v1877 = vpop.xlane.xlu0 %1876
        %v1878 = vadd.f32 %v1877, 1e-12
        %v1879 = vrsqrt.pop %v1878
        %v1880 = vmul.f32 %v1877, %v1879
        %v1881 = vsub.f32 0.0, %v1880
        %v1883 = vlaneseq
        %v1884 = vand.u32 %v1883, 127
        %v1885 = vlaneseq
        %v1886 = vshrl.u32 %v1885, 7
        %v1887 = vsub.s32 %v1884, %v1886
        %v1888 = vrot.slane %v1881, %v1887
        %vm1890 = vcmask 24576
        %1891 = vst.msk [vmem:[%s562] sm:$0x1] %vm1890, %v1888
        %v1892 = vld [vmem:[%s588] sm:$0xff]
        %v1893 = vadd.f32 %v1892, %v1867
        %v1895 = vrot.slane %v1892, 4
        %v1897 = vsub.f32 %v1893, %v1895
        %v1898 = vmul.f32 %v1897, %v1897
        %v1899 = vsel %vm1874, %v1898, 0.0
        %1900 = vadd.xlane.f32.xlu0 %v1899
        %v1901 = vpop.xlane.xlu0 %1900
        %v1902 = vadd.f32 %v1901, 1e-12
        %v1903 = vrsqrt.pop %v1902
        %v1904 = vmul.f32 %v1901, %v1903
        %v1905 = vsub.f32 0.0, %v1904
        %v1907 = vlaneseq
        %v1908 = vshrl.u32 %v1907, 7
        %v1909 = vsub.s32 %v1884, %v1908
        %v1910 = vrot.slane %v1905, %v1909
        %1912 = vst.msk [vmem:[%s568] sm:$0x1] %vm1890, %v1910
        %s1913 = sand.u32 %s377, 1
        %s1914 = scalar_lea.sflag [#allocation3], %s1913
        %s1915 = sand.u32 %s377, 1
        %s1916 = scalar_lea.vmem [#allocation2], %s1915
        %s1917 = sand.u32 %s403, 1
        %s1918 = scalar_lea.sflag [#allocation5], %s1917
        %s1919 = sand.u32 %s403, 1
        %s1920 = scalar_lea.vmem [#allocation4], %s1919
        // Predicated region
        $region81: #{metar_forward.1} parent=79 // pred_check
          %p1921 = pneg %p387
        $region82: #{metar_forward.1} parent=79 // pred_check_branch
          %1923 = sbr.rel (%p1921) target = $region84
        $region83: #{metar_forward.1} parent=79 // pred_region
          %s1925 = ssub.s32 16, 16
          %1926 = vsyncadd %s1914, %s1925
          %s1927 = smul.addr %s34, 16
          %s1928 = scalar_lea.hbm %s15, %s1927
          %s1930 = sshll.u32 %s1916, 4
          %s1931 = int_to_ptr.vmem [resolvable:$true] %s1930
          %1933 = dma.vmem_to_hbm [thread:$0]  %s1931, 16, %s1928, %s1914
        $region84: #{metar_forward.1} parent=79 // pred_fallthru
          _
        // Predicated region
        $region85: #{metar_forward.1} parent=79 // pred_check
          %p1934 = pneg %p413
        $region86: #{metar_forward.1} parent=79 // pred_check_branch
          %1936 = sbr.rel (%p1934) target = $region88
        $region87: #{metar_forward.1} parent=79 // pred_region
          %s1938 = ssub.s32 16, 16
          %1939 = vsyncadd %s1918, %s1938
          %s1940 = smul.addr %s34, 16
          %s1941 = scalar_lea.hbm %s16, %s1940
          %s1943 = sshll.u32 %s1920, 4
          %s1944 = int_to_ptr.vmem [resolvable:$true] %s1943
          %1946 = dma.vmem_to_hbm [thread:$0]  %s1944, 16, %s1941, %s1918
        $region88: #{metar_forward.1} parent=79 // pred_fallthru
          _
      $region80: #{metar_forward.1} parent=5 // pred_fallthru
        _
      %p1947 = scmp.le.s32.totalorder 2, %s29
      // Predicated region
      $region89: #{metar_forward.1} parent=5 // pred_check
        %p1948 = pneg %p1947
      $region90: #{metar_forward.1} parent=5 // pred_check_branch
        %1950 = sbr.rel (%p1948) target = $region92
      $region91: #{metar_forward.1} parent=5 // pred_region
        %s1951 = ssub.s32 %s29, 2
        // Predicated region
        $region93: #{metar_forward.1} parent=91 // pred_check
          %p1952 = pneg %p393
        $region94: #{metar_forward.1} parent=91 // pred_check_branch
          %1954 = sbr.rel (%p1952) target = $region96
        $region95: #{metar_forward.1} parent=91 // pred_region
          %s1955 = sand.u32 %s378, 1
          %s1956 = scalar_lea.sflag [#allocation3], %s1955
          %s1957 = sand.u32 %s378, 1
          %s1958 = scalar_lea.vmem [#allocation2], %s1957
          %1959 = dma.done %s1956, 16
        $region96: #{metar_forward.1} parent=91 // pred_fallthru
          _
        // Predicated region
        $region97: #{metar_forward.1} parent=91 // pred_check
          %p1960 = pneg %p419
        $region98: #{metar_forward.1} parent=91 // pred_check_branch
          %1962 = sbr.rel (%p1960) target = $region100
        $region99: #{metar_forward.1} parent=91 // pred_region
          %s1963 = sand.u32 %s404, 1
          %s1964 = scalar_lea.sflag [#allocation5], %s1963
          %s1965 = sand.u32 %s404, 1
          %s1966 = scalar_lea.vmem [#allocation4], %s1965
          %1967 = dma.done %s1964, 16
        $region100: #{metar_forward.1} parent=91 // pred_fallthru
          _
      $region92: #{metar_forward.1} parent=5 // pred_fallthru
        _
    $region6: #{metar_forward.1} parent=1 // loop_footer
      %s33 = sadd.s32 1, %s29
    $region7: #{metar_forward.1} parent=1 // loop_footer_branch
      %28 = sbr.rel target = $region3
    $region8: #{metar_forward.1} parent=1 // loop_exit
      _
    %1968 = vsyncpa [#allocation3], 1
    %s1969 = scalar_lea.sflag [#allocation3], 1
    %1970 = vsyncpa %s1969, 1
    %1971 = vsyncpa [#allocation5], 1
    %s1972 = scalar_lea.sflag [#allocation5], 1
    %1973 = vsyncpa %s1972, 1

</llo_original>
